<compile_context>
chip_gen: v7x
topology: tpu7x:2x2x1
jax: 0.10.0
libtpu: 0.0.40
codegen_flags: <defaults>
</compile_context>

<pallas_src>
import functools

import jax
import jax.numpy as jnp
from jax import lax
from jax.experimental import pallas as pl
from jax.experimental.pallas import tpu as pltpu


# ----------------------------------------------------------------------------
# Pallas kernel: full 5-layer MLP forward for one batch tile.
# ----------------------------------------------------------------------------
def _mlp_kernel(x_ref,
                w1_ref, b1_ref,
                w2_ref, b2_ref,
                w3_ref, b3_ref,
                w4_ref, b4_ref,
                w5_ref, b5_ref,
                o_ref):
    # fc1..fc4: bf16 MXU matmuls, fp32 accumulation, fp32 ReLU epilogue.
    h = x_ref[...].astype(jnp.bfloat16)                       # (TB, F) bf16
    a = None
    for w_ref, b_ref in ((w1_ref, b1_ref), (w2_ref, b2_ref),
                         (w3_ref, b3_ref), (w4_ref, b4_ref)):
        a = jnp.dot(h, w_ref[...],
                    preferred_element_type=jnp.float32) + b_ref[...]
        a = jnp.maximum(a, 0.0)                                # fp32 relu
        h = a.astype(jnp.bfloat16)                             # bf16 feed for next MXU pass

    # fc11 (16 -> 1): contract the 16-wide axis of (TB, 16) against w5 (1, 16),
    # producing a lane-dense (1, TB) row directly (no (TB, 1) masked store).
    z = lax.dot_general(w5_ref[...], a,
                        (((1,), (1,)), ((), ())),
                        preferred_element_type=jnp.float32)    # (1, TB)
    z = z + b5_ref[...]                                        # (1, 1) broadcast

    # sigmoid: exp + approx reciprocal both land on the EUP slot.
    o_ref[...] = pl.reciprocal(1.0 + jnp.exp(-z), approx=True)


def _round_up(n, m):
    return ((n + m - 1) // m) * m


# ----------------------------------------------------------------------------
# Wrapper: tiles over the batch dimension; weights broadcast to every tile.
# ----------------------------------------------------------------------------
@functools.partial(jax.jit, static_argnames=("batch_tile",))
def net_forward(x, params, *, batch_tile=256):
    B, F = x.shape
    (w1, b1), (w2, b2), (w3, b3), (w4, b4), (w5, b5) = params

    # Cast the big weights once to bf16 (halves weight DMA, feeds the bf16 MXU).
    w1, w2, w3, w4 = (w.astype(jnp.bfloat16) for w in (w1, w2, w3, w4))

    # Batch tile: 256 rows (full v6e/v7x MXU M-dim; 2x the v5e tile), but never
    # larger than the (8-aligned) batch so tiny batches stay a single cheap step.
    tb = min(batch_tile, _round_up(B, 8))
    b_pad = _round_up(B, tb)
    if b_pad != B:
        x = jnp.pad(x, ((0, b_pad - B), (0, 0)))
    num_tiles = b_pad // tb

    def full_spec(arr):
        # Whole array as one block, same block index every grid step
        # (pipeline skips re-DMA when the block index is unchanged).
        return pl.BlockSpec(arr.shape, lambda i: (0,) * arr.ndim)

    in_specs = [pl.BlockSpec((tb, F), lambda i: (i, 0))]
    for p in (w1, b1, w2, b2, w3, b3, w4, b4, w5, b5):
        in_specs.append(full_spec(p))

    # Lane-dense output: (1, b_pad) with TB on the lane axis.
    out_spec = pl.BlockSpec((1, tb), lambda i: (0, i))

    out = pl.pallas_call(
        _mlp_kernel,
        out_shape=jax.ShapeDtypeStruct((1, b_pad), jnp.float32),
        grid_spec=pltpu.PrefetchScalarGridSpec(
            num_scalar_prefetch=0,
            grid=(num_tiles,),
            in_specs=in_specs,
            out_specs=out_spec,
        ),
        compiler_params=pltpu.CompilerParams(
            dimension_semantics=("parallel",),
        ),
    )(x, w1, b1, w2, b2, w3, b3, w4, b4, w5, b5)

    return out[0, :B].reshape(B, 1)


# ----------------------------------------------------------------------------
# Deterministic parameter init (mirrors the nn.Linear shapes of Net.__init__).
# ----------------------------------------------------------------------------
def init_params(key, input_shape):
    dims = [(input_shape, 1024), (1024, 512), (512, 256), (256, 16), (16, 1)]
    params = []
    for li, (fan_in, fan_out) in enumerate(dims):
        key, kw, kb = jax.random.split(key, 3)
        if li == 0:
            # xavier_uniform_ for fc1.weight (as in the PyTorch module)
            limit = float(jnp.sqrt(6.0 / (fan_in + fan_out)))
        else:
            # PyTorch default Linear init: U(-1/sqrt(fan_in), 1/sqrt(fan_in))
            limit = float(1.0 / jnp.sqrt(jnp.float32(fan_in)))
        if li < 4:
            # stored [in, out] so the kernel does x @ W on the MXU
            w = jax.random.uniform(kw, (fan_in, fan_out), jnp.float32, -limit, limit)
            b = jax.random.uniform(kb, (1, fan_out), jnp.float32,
                                   -1.0 / fan_in ** 0.5, 1.0 / fan_in ** 0.5)
        else:
            # final 16->1 layer stored in PyTorch [out, in] = (1, 16) layout
            w = jax.random.uniform(kw, (1, fan_in), jnp.float32, -limit, limit)
            b = jax.random.uniform(kb, (1, 1), jnp.float32,
                                   -1.0 / fan_in ** 0.5, 1.0 / fan_in ** 0.5)
        params.append((w, b))
    return params


# Pure-JAX reference mirroring the kernel's bf16-matmul / fp32-accumulate math.
def net_forward_ref(x, params):
    (w1, b1), (w2, b2), (w3, b3), (w4, b4), (w5, b5) = params
    h = x
    for w, b in ((w1, b1), (w2, b2), (w3, b3), (w4, b4)):
        h = jnp.dot(h.astype(jnp.bfloat16), w.astype(jnp.bfloat16),
                    preferred_element_type=jnp.float32) + b
        h = jnp.maximum(h, 0.0)
    z = h @ w5.T + b5                                    # (B, 1)
    return jax.nn.sigmoid(z)


if __name__ == "__main__":
    key = jax.random.PRNGKey(0)
    B, F = 16, 32                      # small synthetic batch / feature count
    kx, kp = jax.random.split(key)
    x = jax.random.normal(kx, (B, F), jnp.float32)
    params = init_params(kp, F)

    out = net_forward(x, params)
    out = jax.block_until_ready(out)

    ref = net_forward_ref(x, params)
    assert out.shape == (B, 1)
    assert jnp.allclose(out, ref, atol=5e-3, rtol=0.0), "mismatch vs reference"

    print("KERNEL_OK")
</pallas_src>

<mosaic_0001>
module attributes {stable_mosaic.version = 11 : i64} {
  func.func @_mlp_kernel(%arg0: i32, %arg1: memref<16x32xf32, #tpu.memory_space<vmem>>, %arg2: memref<32x1024xbf16, #tpu.memory_space<vmem>>, %arg3: memref<1x1024xf32, #tpu.memory_space<vmem>>, %arg4: memref<1024x512xbf16, #tpu.memory_space<vmem>>, %arg5: memref<1x512xf32, #tpu.memory_space<vmem>>, %arg6: memref<512x256xbf16, #tpu.memory_space<vmem>>, %arg7: memref<1x256xf32, #tpu.memory_space<vmem>>, %arg8: memref<256x16xbf16, #tpu.memory_space<vmem>>, %arg9: memref<1x16xf32, #tpu.memory_space<vmem>>, %arg10: memref<1x16xf32, #tpu.memory_space<vmem>>, %arg11: memref<1x1xf32, #tpu.memory_space<vmem>>, %arg12: memref<1x16xf32, #tpu.memory_space<vmem>>) attributes {dimension_semantics = [#tpu.dimension_semantics<parallel>], iteration_bounds = array<i64: 1>, scalar_prefetch = 0 : i64, scratch_operands = 0 : i64, tpu.core_type = #tpu.core_type<tc>, window_params = [{transform_indices = @transform_0, window_bounds = array<i64: 16, 32>}, {pipeline_mode = #tpu.pipeline_mode<synchronous>, transform_indices = @transform_1, window_bounds = array<i64: 32, 1024>}, {pipeline_mode = #tpu.pipeline_mode<synchronous>, transform_indices = @transform_2, window_bounds = array<i64: 1, 1024>}, {pipeline_mode = #tpu.pipeline_mode<synchronous>, transform_indices = @transform_3, window_bounds = array<i64: 1024, 512>}, {pipeline_mode = #tpu.pipeline_mode<synchronous>, transform_indices = @transform_4, window_bounds = array<i64: 1, 512>}, {pipeline_mode = #tpu.pipeline_mode<synchronous>, transform_indices = @transform_5, window_bounds = array<i64: 512, 256>}, {pipeline_mode = #tpu.pipeline_mode<synchronous>, transform_indices = @transform_6, window_bounds = array<i64: 1, 256>}, {pipeline_mode = #tpu.pipeline_mode<synchronous>, transform_indices = @transform_7, window_bounds = array<i64: 256, 16>}, {pipeline_mode = #tpu.pipeline_mode<synchronous>, transform_indices = @transform_8, window_bounds = array<i64: 1, 16>}, {pipeline_mode = #tpu.pipeline_mode<synchronous>, transform_indices = @transform_9, window_bounds = array<i64: 1, 16>}, {pipeline_mode = #tpu.pipeline_mode<synchronous>, transform_indices = @transform_10, window_bounds = array<i64: 1, 1>}, {transform_indices = @transform_11, window_bounds = array<i64: 1, 16>}]} {
    %c0 = arith.constant 0 : index
    %c0_0 = arith.constant 0 : index
    %0 = vector.load %arg1[%c0, %c0_0] : memref<16x32xf32, #tpu.memory_space<vmem>>, vector<16x32xf32>
    %1 = arith.truncf %0 : vector<16x32xf32> to vector<16x32xbf16>
    %c0_1 = arith.constant 0 : index
    %c0_2 = arith.constant 0 : index
    %2 = vector.load %arg2[%c0_1, %c0_2] : memref<32x1024xbf16, #tpu.memory_space<vmem>>, vector<32x1024xbf16>
    %cst = arith.constant dense<0.000000e+00> : vector<16x1024xf32>
    %3 = tpu.matmul %1, %2, %cst {dimension_numbers = #tpu.dot_dimension_numbers<[1], [0], [0], [1], [0, 0, 1, 1], [], []>} : vector<16x32xbf16>, vector<32x1024xbf16>, vector<16x1024xf32> -> vector<16x1024xf32>
    %c0_3 = arith.constant 0 : index
    %c0_4 = arith.constant 0 : index
    %4 = vector.load %arg3[%c0_3, %c0_4] : memref<1x1024xf32, #tpu.memory_space<vmem>>, vector<1x1024xf32>
    %5 = vector.broadcast %4 : vector<1x1024xf32> to vector<16x1024xf32>
    %6 = arith.addf %3, %5 : vector<16x1024xf32>
    %cst_5 = arith.constant 0.000000e+00 : f32
    %7 = vector.broadcast %cst_5 : f32 to vector<16x1024xf32>
    %8 = arith.maximumf %6, %7 : vector<16x1024xf32>
    %9 = arith.truncf %8 : vector<16x1024xf32> to vector<16x1024xbf16>
    %c0_6 = arith.constant 0 : index
    %c0_7 = arith.constant 0 : index
    %10 = vector.load %arg4[%c0_6, %c0_7] : memref<1024x512xbf16, #tpu.memory_space<vmem>>, vector<1024x512xbf16>
    %cst_8 = arith.constant dense<0.000000e+00> : vector<16x512xf32>
    %11 = tpu.matmul %9, %10, %cst_8 {dimension_numbers = #tpu.dot_dimension_numbers<[1], [0], [0], [1], [0, 0, 1, 1], [], []>} : vector<16x1024xbf16>, vector<1024x512xbf16>, vector<16x512xf32> -> vector<16x512xf32>
    %c0_9 = arith.constant 0 : index
    %c0_10 = arith.constant 0 : index
    %12 = vector.load %arg5[%c0_9, %c0_10] : memref<1x512xf32, #tpu.memory_space<vmem>>, vector<1x512xf32>
    %13 = vector.broadcast %12 : vector<1x512xf32> to vector<16x512xf32>
    %14 = arith.addf %11, %13 : vector<16x512xf32>
    %cst_11 = arith.constant 0.000000e+00 : f32
    %15 = vector.broadcast %cst_11 : f32 to vector<16x512xf32>
    %16 = arith.maximumf %14, %15 : vector<16x512xf32>
    %17 = arith.truncf %16 : vector<16x512xf32> to vector<16x512xbf16>
    %c0_12 = arith.constant 0 : index
    %c0_13 = arith.constant 0 : index
    %18 = vector.load %arg6[%c0_12, %c0_13] : memref<512x256xbf16, #tpu.memory_space<vmem>>, vector<512x256xbf16>
    %cst_14 = arith.constant dense<0.000000e+00> : vector<16x256xf32>
    %19 = tpu.matmul %17, %18, %cst_14 {dimension_numbers = #tpu.dot_dimension_numbers<[1], [0], [0], [1], [0, 0, 1, 1], [], []>} : vector<16x512xbf16>, vector<512x256xbf16>, vector<16x256xf32> -> vector<16x256xf32>
    %c0_15 = arith.constant 0 : index
    %c0_16 = arith.constant 0 : index
    %20 = vector.load %arg7[%c0_15, %c0_16] : memref<1x256xf32, #tpu.memory_space<vmem>>, vector<1x256xf32>
    %21 = vector.broadcast %20 : vector<1x256xf32> to vector<16x256xf32>
    %22 = arith.addf %19, %21 : vector<16x256xf32>
    %cst_17 = arith.constant 0.000000e+00 : f32
    %23 = vector.broadcast %cst_17 : f32 to vector<16x256xf32>
    %24 = arith.maximumf %22, %23 : vector<16x256xf32>
    %25 = arith.truncf %24 : vector<16x256xf32> to vector<16x256xbf16>
    %c0_18 = arith.constant 0 : index
    %c0_19 = arith.constant 0 : index
    %26 = vector.load %arg8[%c0_18, %c0_19] : memref<256x16xbf16, #tpu.memory_space<vmem>>, vector<256x16xbf16>
    %cst_20 = arith.constant dense<0.000000e+00> : vector<16x16xf32>
    %27 = tpu.matmul %25, %26, %cst_20 {dimension_numbers = #tpu.dot_dimension_numbers<[1], [0], [0], [1], [0, 0, 1, 1], [], []>} : vector<16x256xbf16>, vector<256x16xbf16>, vector<16x16xf32> -> vector<16x16xf32>
    %c0_21 = arith.constant 0 : index
    %c0_22 = arith.constant 0 : index
    %28 = vector.load %arg9[%c0_21, %c0_22] : memref<1x16xf32, #tpu.memory_space<vmem>>, vector<1x16xf32>
    %29 = vector.broadcast %28 : vector<1x16xf32> to vector<16x16xf32>
    %30 = arith.addf %27, %29 : vector<16x16xf32>
    %cst_23 = arith.constant 0.000000e+00 : f32
    %31 = vector.broadcast %cst_23 : f32 to vector<16x16xf32>
    %32 = arith.maximumf %30, %31 : vector<16x16xf32>
    %c0_24 = arith.constant 0 : index
    %c0_25 = arith.constant 0 : index
    %33 = vector.load %arg10[%c0_24, %c0_25] : memref<1x16xf32, #tpu.memory_space<vmem>>, vector<1x16xf32>
    %cst_26 = arith.constant dense<0.000000e+00> : vector<1x16xf32>
    %34 = tpu.matmul %33, %32, %cst_26 {dimension_numbers = #tpu.dot_dimension_numbers<[1], [1], [0], [0], [0, 0, 1, 0], [], []>} : vector<1x16xf32>, vector<16x16xf32>, vector<1x16xf32> -> vector<1x16xf32>
    %c0_27 = arith.constant 0 : index
    %c0_28 = arith.constant 0 : index
    %35 = vector.load %arg11[%c0_27, %c0_28] : memref<1x1xf32, #tpu.memory_space<vmem>>, vector<1x1xf32>
    %36 = vector.broadcast %35 : vector<1x1xf32> to vector<1x16xf32>
    %37 = arith.addf %34, %36 : vector<1x16xf32>
    %cst_29 = arith.constant 0.000000e+00 : f32
    %38 = vector.broadcast %cst_29 : f32 to vector<1x16xf32>
    %39 = arith.subf %38, %37 : vector<1x16xf32>
    %40 = math.exp %39 : vector<1x16xf32>
    %cst_30 = arith.constant 1.000000e+00 : f32
    %41 = vector.broadcast %cst_30 : f32 to vector<1x16xf32>
    %42 = arith.addf %41, %40 : vector<1x16xf32>
    %43 = tpu.reciprocal %42 {approx = true} : vector<1x16xf32> -> vector<1x16xf32>
    %c0_31 = arith.constant 0 : index
    %c0_32 = arith.constant 0 : index
    %44 = vector.load %arg12[%c0_31, %c0_32] : memref<1x16xf32, #tpu.memory_space<vmem>>, vector<1x16xf32>
    tpu.vector_store %arg12[%c0_31, %c0_32], %43 {strides = array<i32>} : memref<1x16xf32, #tpu.memory_space<vmem>>, vector<1x16xf32>,
    return
  }
  func.func @transform_0(%arg0: i32) -> (i32, i32) {
    %c0_i32 = arith.constant 0 : i32
    %c0_i32_0 = arith.constant 0 : i32
    return %arg0, %c0_i32 : i32, i32
  }
  func.func @transform_1(%arg0: i32) -> (i32, i32) {
    %c0_i32 = arith.constant 0 : i32
    %c0_i32_0 = arith.constant 0 : i32
    %c0_i32_1 = arith.constant 0 : i32
    return %c0_i32, %c0_i32_0 : i32, i32
  }
  func.func @transform_2(%arg0: i32) -> (i32, i32) {
    %c0_i32 = arith.constant 0 : i32
    %c0_i32_0 = arith.constant 0 : i32
    %c0_i32_1 = arith.constant 0 : i32
    return %c0_i32, %c0_i32_0 : i32, i32
  }
  func.func @transform_3(%arg0: i32) -> (i32, i32) {
    %c0_i32 = arith.constant 0 : i32
    %c0_i32_0 = arith.constant 0 : i32
    %c0_i32_1 = arith.constant 0 : i32
    return %c0_i32, %c0_i32_0 : i32, i32
  }
  func.func @transform_4(%arg0: i32) -> (i32, i32) {
    %c0_i32 = arith.constant 0 : i32
    %c0_i32_0 = arith.constant 0 : i32
    %c0_i32_1 = arith.constant 0 : i32
    return %c0_i32, %c0_i32_0 : i32, i32
  }
  func.func @transform_5(%arg0: i32) -> (i32, i32) {
    %c0_i32 = arith.constant 0 : i32
    %c0_i32_0 = arith.constant 0 : i32
    %c0_i32_1 = arith.constant 0 : i32
    return %c0_i32, %c0_i32_0 : i32, i32
  }
  func.func @transform_6(%arg0: i32) -> (i32, i32) {
    %c0_i32 = arith.constant 0 : i32
    %c0_i32_0 = arith.constant 0 : i32
    %c0_i32_1 = arith.constant 0 : i32
    return %c0_i32, %c0_i32_0 : i32, i32
  }
  func.func @transform_7(%arg0: i32) -> (i32, i32) {
    %c0_i32 = arith.constant 0 : i32
    %c0_i32_0 = arith.constant 0 : i32
    %c0_i32_1 = arith.constant 0 : i32
    return %c0_i32, %c0_i32_0 : i32, i32
  }
  func.func @transform_8(%arg0: i32) -> (i32, i32) {
    %c0_i32 = arith.constant 0 : i32
    %c0_i32_0 = arith.constant 0 : i32
    %c0_i32_1 = arith.constant 0 : i32
    return %c0_i32, %c0_i32_0 : i32, i32
  }
  func.func @transform_9(%arg0: i32) -> (i32, i32) {
    %c0_i32 = arith.constant 0 : i32
    %c0_i32_0 = arith.constant 0 : i32
    %c0_i32_1 = arith.constant 0 : i32
    return %c0_i32, %c0_i32_0 : i32, i32
  }
  func.func @transform_10(%arg0: i32) -> (i32, i32) {
    %c0_i32 = arith.constant 0 : i32
    %c0_i32_0 = arith.constant 0 : i32
    %c0_i32_1 = arith.constant 0 : i32
    return %c0_i32, %c0_i32_0 : i32, i32
  }
  func.func @transform_11(%arg0: i32) -> (i32, i32) {
    %c0_i32 = arith.constant 0 : i32
    %c0_i32_0 = arith.constant 0 : i32
    return %c0_i32, %arg0 : i32, i32
  }
}

</mosaic_0001>

<llo_original>
// kernel: net_forward.1
$region0: #{net_forward.1}
  #allocation0 [shape = 'u32[]', space=smem, size = 0x4, offset = 0x4, fixed_abs, tag = 'smem constant byte address 0x4 - core index']
  #allocation1 [shape = 'u32[144,128]{1,0:T(1,128)}', space=vmem, size = 0x12000, scoped, tag = 'internal scratch']
  #allocation2 [shape = 'f32[1,1]{1,0:T(1,128)S(1)}', space=vmem, size = 0x200, scoped, tag = 'scoped memory for net_forward.1']
  %s0 = inlined_call_operand.vmem [shape: f32[16,32], index: 0, kind: input, shape index: {}]
  %s1 = inlined_call_operand.vmem [shape: bf16[32,1024], index: 1, kind: input, shape index: {}]
  %s2 = inlined_call_operand.vmem [shape: f32[1,1024], index: 2, kind: input, shape index: {}]
  %s3 = inlined_call_operand.vmem [shape: bf16[1024,512], index: 3, kind: input, shape index: {}]
  %s4 = inlined_call_operand.vmem [shape: f32[1,512], index: 4, kind: input, shape index: {}]
  %s5 = inlined_call_operand.vmem [shape: bf16[512,256], index: 5, kind: input, shape index: {}]
  %s6 = inlined_call_operand.vmem [shape: f32[1,256], index: 6, kind: input, shape index: {}]
  %s7 = inlined_call_operand.vmem [shape: bf16[256,16], index: 7, kind: input, shape index: {}]
  %s8 = inlined_call_operand.vmem [shape: f32[1,16], index: 8, kind: input, shape index: {}]
  %s9 = inlined_call_operand.vmem [shape: f32[1,16], index: 9, kind: input, shape index: {}]
  %s10 = inlined_call_operand.<no memory space> [shape: f32[1,1], index: 10, kind: input, shape index: {}]
  %s11 = inlined_call_operand.hbm [shape: f32[1,16], index: 11, kind: output, shape index: {}]
  %s12 = sld [smem:[#allocation0]]
  $region54: #{net_forward.1} parent=0
    _
  %s14 = ssub.s32 1, %s12
  %s15 = scalar_select 0, %s14, %s12
  %v16 = vstv %s10
  %17 = vst [vmem:[#allocation2] sm:$0x1] %v16
  $region1: #{net_forward.1} parent=0
    #allocation3 [shape = 'u8[512]{0}', space=vmem, size = 0x400, scoped, tag = 'output window, operand 0, single buffered']
    #allocation4 [shape = 's32[1]{0}', space=sflag, size = 0x4, scoped, tag = 'scoped memory for net_forward.1']
    %18 = vsyncpa [#allocation4], 0
    // Predicated region
    $region2: #{net_forward.1} parent=1 // pred_check
      _
    $region3: #{net_forward.1} parent=1 // pred_check_branch
      %20 = sbr.rel (0) target = $region5
    $region4: #{net_forward.1} parent=1 // pred_region
      _
    $region5: #{net_forward.1} parent=1 // pred_fallthru
      _
    // Predicated region
    $region6: #{net_forward.1} parent=1 // pred_check
      _
    $region7: #{net_forward.1} parent=1 // pred_check_branch
      %22 = sbr.rel (0) target = $region9
    $region8: #{net_forward.1} parent=1 // pred_region
      _
    $region9: #{net_forward.1} parent=1 // pred_fallthru
      _
    // Predicated region
    $region10: #{net_forward.1} parent=1 // pred_check
      _
    $region11: #{net_forward.1} parent=1 // pred_check_branch
      %24 = sbr.rel (0) target = $region13
    $region12: #{net_forward.1} parent=1 // pred_region
      _
    $region13: #{net_forward.1} parent=1 // pred_fallthru
      _
    // Predicated region
    $region14: #{net_forward.1} parent=1 // pred_check
      _
    $region15: #{net_forward.1} parent=1 // pred_check_branch
      %26 = sbr.rel (0) target = $region17
    $region16: #{net_forward.1} parent=1 // pred_region
      _
    $region17: #{net_forward.1} parent=1 // pred_fallthru
      _
    // Predicated region
    $region18: #{net_forward.1} parent=1 // pred_check
      _
    $region19: #{net_forward.1} parent=1 // pred_check_branch
      %28 = sbr.rel (0) target = $region21
    $region20: #{net_forward.1} parent=1 // pred_region
      _
    $region21: #{net_forward.1} parent=1 // pred_fallthru
      _
    // Predicated region
    $region22: #{net_forward.1} parent=1 // pred_check
      _
    $region23: #{net_forward.1} parent=1 // pred_check_branch
      %30 = sbr.rel (0) target = $region25
    $region24: #{net_forward.1} parent=1 // pred_region
      _
    $region25: #{net_forward.1} parent=1 // pred_fallthru
      _
    // Predicated region
    $region26: #{net_forward.1} parent=1 // pred_check
      _
    $region27: #{net_forward.1} parent=1 // pred_check_branch
      %32 = sbr.rel (0) target = $region29
    $region28: #{net_forward.1} parent=1 // pred_region
      _
    $region29: #{net_forward.1} parent=1 // pred_fallthru
      _
    // Predicated region
    $region30: #{net_forward.1} parent=1 // pred_check
      _
    $region31: #{net_forward.1} parent=1 // pred_check_branch
      %34 = sbr.rel (0) target = $region33
    $region32: #{net_forward.1} parent=1 // pred_region
      _
    $region33: #{net_forward.1} parent=1 // pred_fallthru
      _
    // Predicated region
    $region34: #{net_forward.1} parent=1 // pred_check
      _
    $region35: #{net_forward.1} parent=1 // pred_check_branch
      %36 = sbr.rel (0) target = $region37
    $region36: #{net_forward.1} parent=1 // pred_region
      _
    $region37: #{net_forward.1} parent=1 // pred_fallthru
      _
    // Predicated region
    $region38: #{net_forward.1} parent=1 // pred_check
      _
    $region39: #{net_forward.1} parent=1 // pred_check_branch
      %38 = sbr.rel (0) target = $region41
    $region40: #{net_forward.1} parent=1 // pred_region
      _
    $region41: #{net_forward.1} parent=1 // pred_fallthru
      _
    // Predicated region
    $region42: #{net_forward.1} parent=1 // pred_check
      _
    $region43: #{net_forward.1} parent=1 // pred_check_branch
      %40 = sbr.rel (0) target = $region45
    $region44: #{net_forward.1} parent=1 // pred_region
      _
    $region45: #{net_forward.1} parent=1 // pred_fallthru
      _
    %v42 = vld [vmem:[%s0] sm:$0xff]
    %v43 = vld [vmem:[%s0 + $0x8] sm:$0xff]
    %v44 = vpack.c.bf16 %v43, %v42
    %v45 = vld [vmem:[%s1] sm:$0xff]
    %v46 = vld [vmem:[%s1 + $0x8] sm:$0xff]
    %v47 = vld [vmem:[%s1 + $0x10] sm:$0xff]
    %v48 = vld [vmem:[%s1 + $0x18] sm:$0xff]
    %v49 = vld [vmem:[%s1 + $0x20] sm:$0xff]
    %v50 = vld [vmem:[%s1 + $0x28] sm:$0xff]
    %v51 = vld [vmem:[%s1 + $0x30] sm:$0xff]
    %v52 = vld [vmem:[%s1 + $0x38] sm:$0xff]
    %v53 = vld [vmem:[%s1 + $0x40] sm:$0xff]
    %v54 = vld [vmem:[%s1 + $0x48] sm:$0xff]
    %v55 = vld [vmem:[%s1 + $0x50] sm:$0xff]
    %v56 = vld [vmem:[%s1 + $0x58] sm:$0xff]
    %v57 = vld [vmem:[%s1 + $0x60] sm:$0xff]
    %v58 = vld [vmem:[%s1 + $0x68] sm:$0xff]
    %v59 = vld [vmem:[%s1 + $0x70] sm:$0xff]
    %v60 = vld [vmem:[%s1 + $0x78] sm:$0xff]
    %v61 = vld [vmem:[%s2] sm:$0xff]
    %v63 = vlaneseq
    %v64 = vshrl.u32 %v63, 7
    %v65 = vsub.s32 0, %v64
    %v66 = vrot.slane %v61, %v65
    %v67 = vlaneseq
    %v68 = vshrl.u32 %v67, 7
    %v69 = vsub.s32 1, %v68
    %v70 = vrot.slane %v61, %v69
    %v71 = vlaneseq
    %v72 = vshrl.u32 %v71, 7
    %v73 = vsub.s32 2, %v72
    %v74 = vrot.slane %v61, %v73
    %v75 = vlaneseq
    %v76 = vshrl.u32 %v75, 7
    %v77 = vsub.s32 3, %v76
    %v78 = vrot.slane %v61, %v77
    %v79 = vlaneseq
    %v80 = vshrl.u32 %v79, 7
    %v81 = vsub.s32 4, %v80
    %v82 = vrot.slane %v61, %v81
    %v83 = vlaneseq
    %v84 = vshrl.u32 %v83, 7
    %v85 = vsub.s32 5, %v84
    %v86 = vrot.slane %v61, %v85
    %v87 = vlaneseq
    %v88 = vshrl.u32 %v87, 7
    %v89 = vsub.s32 6, %v88
    %v90 = vrot.slane %v61, %v89
    %v91 = vlaneseq
    %v92 = vshrl.u32 %v91, 7
    %v93 = vsub.s32 7, %v92
    %v94 = vrot.slane %v61, %v93
    %v119 = vunpack.c.l.b16 %v45
    %v120 = vunpack.c.h.b16 %v45
    %v121 = vunpack.c.l.b16 %v46
    %v122 = vunpack.c.h.b16 %v46
    %v123 = vunpack.c.l.b16 %v47
    %v124 = vunpack.c.h.b16 %v47
    %v125 = vunpack.c.l.b16 %v48
    %v126 = vunpack.c.h.b16 %v48
    %v127 = vunpack.c.l.b16 %v49
    %v128 = vunpack.c.h.b16 %v49
    %v129 = vunpack.c.l.b16 %v50
    %v130 = vunpack.c.h.b16 %v50
    %v131 = vunpack.c.l.b16 %v51
    %v132 = vunpack.c.h.b16 %v51
    %v133 = vunpack.c.l.b16 %v52
    %v134 = vunpack.c.h.b16 %v52
    %v135 = vunpack.c.l.b16 %v53
    %v136 = vunpack.c.h.b16 %v53
    %v137 = vunpack.c.l.b16 %v54
    %v138 = vunpack.c.h.b16 %v54
    %v139 = vunpack.c.l.b16 %v55
    %v140 = vunpack.c.h.b16 %v55
    %v141 = vunpack.c.l.b16 %v56
    %v142 = vunpack.c.h.b16 %v56
    %v143 = vunpack.c.l.b16 %v57
    %v144 = vunpack.c.h.b16 %v57
    %v145 = vunpack.c.l.b16 %v58
    %v146 = vunpack.c.h.b16 %v58
    %v147 = vunpack.c.l.b16 %v59
    %v148 = vunpack.c.h.b16 %v59
    %v149 = vunpack.c.l.b16 %v60
    %v150 = vunpack.c.h.b16 %v60
    %v151 = vpack.c.b16 %v127, %v119
    %v152 = vpack.c.b16 %v128, %v120
    %v153 = vpack.c.b16 %v129, %v121
    %v154 = vpack.c.b16 %v130, %v122
    %v155 = vpack.c.b16 %v131, %v123
    %v156 = vpack.c.b16 %v132, %v124
    %v157 = vpack.c.b16 %v133, %v125
    %v158 = vpack.c.b16 %v134, %v126
    %v159 = vpack.c.b16 %v143, %v135
    %v160 = vpack.c.b16 %v144, %v136
    %v161 = vpack.c.b16 %v145, %v137
    %v162 = vpack.c.b16 %v146, %v138
    %v163 = vpack.c.b16 %v147, %v139
    %v164 = vpack.c.b16 %v148, %v140
    %v165 = vpack.c.b16 %v149, %v141
    %v166 = vpack.c.b16 %v150, %v142
    %vm183 = vcmask 261120
    %v185 = vsel %vm183, %v44, 0
    %187 = vmatprep.subr.bf16.mxu0 %v152
    %188 = vmatpush1.bf16.msra.mxu0 %v151
    %189 = vmatprep.subr.bf16.mxu0 %v160
    %190 = vmatpush1.bf16.msra.mxu0 %v159
    %191 = vmatprep.subr.bf16.mxu0 0
    %192 = vmatpush1.bf16.msra.mxu0 0
    %193 = vmatprep.subr.bf16.mxu0 0
    %194 = vmatpush1.bf16.msra.mxu0 0
    %195 = vmatprep.subr.bf16.mxu0 0
    %196 = vmatpush1.bf16.msra.mxu0 0
    %197 = vmatprep.subr.bf16.mxu0 0
    %198 = vmatpush1.bf16.msra.mxu0 0
    %199 = vmatprep.subr.bf16.mxu0 0
    %200 = vmatpush1.bf16.msra.mxu0 0
    %201 = vmatprep.subr.bf16.mxu0 0
    %202 = vmatpush1.bf16.msra.mxu0 0
    %203 = vmatprep.subr.bf16.mxu0 0
    %204 = vmatpush1.bf16.msra.mxu0 0
    %205 = vmatprep.subr.bf16.mxu0 0
    %206 = vmatpush1.bf16.msra.mxu0 0
    %207 = vmatprep.subr.bf16.mxu0 0
    %208 = vmatpush1.bf16.msra.mxu0 0
    %209 = vmatprep.subr.bf16.mxu0 0
    %210 = vmatpush1.bf16.msra.mxu0 0
    %211 = vmatprep.subr.bf16.mxu0 0
    %212 = vmatpush1.bf16.msra.mxu0 0
    %213 = vmatprep.subr.bf16.mxu0 0
    %214 = vmatpush1.bf16.msra.mxu0 0
    %215 = vmatprep.subr.bf16.mxu0 0
    %216 = vmatpush1.bf16.msra.mxu0 0
    %217 = vmatprep.subr.bf16.mxu0 0
    %218 = vmatpush1.bf16.msra.mxu0 0
    %219 = vmatprep.mubr.bf16.mxu0 0
    %220 = vmatmul.mubr.bf16.gmra.mrb[0].mxu0 %v185
    %v221 = vpop.f32.mrb[0].mxu0
    %v222 = vadd.f32 %v66, %v221
    %v223 = vpop.f32.mrb[0].mxu0
    %v224 = vadd.f32 %v70, %v223
    %v225 = vpop.f32.mrb[0].mxu0
    %v226 = vadd.f32 %v66, %v225
    %v227 = vpop.f32.mrb[0].mxu0
    %v228 = vadd.f32 %v70, %v227
    %229 = vdwg.mxu0
    %230 = vmatprep.subr.bf16.mxu0 %v154
    %231 = vmatpush1.bf16.msra.mxu0 %v153
    %232 = vmatprep.subr.bf16.mxu0 %v162
    %233 = vmatpush1.bf16.msra.mxu0 %v161
    %234 = vmatprep.subr.bf16.mxu0 0
    %235 = vmatpush1.bf16.msra.mxu0 0
    %236 = vmatprep.subr.bf16.mxu0 0
    %237 = vmatpush1.bf16.msra.mxu0 0
    %238 = vmatprep.subr.bf16.mxu0 0
    %239 = vmatpush1.bf16.msra.mxu0 0
    %240 = vmatprep.subr.bf16.mxu0 0
    %241 = vmatpush1.bf16.msra.mxu0 0
    %242 = vmatprep.subr.bf16.mxu0 0
    %243 = vmatpush1.bf16.msra.mxu0 0
    %244 = vmatprep.subr.bf16.mxu0 0
    %245 = vmatpush1.bf16.msra.mxu0 0
    %246 = vmatprep.subr.bf16.mxu0 0
    %247 = vmatpush1.bf16.msra.mxu0 0
    %248 = vmatprep.subr.bf16.mxu0 0
    %249 = vmatpush1.bf16.msra.mxu0 0
    %250 = vmatprep.subr.bf16.mxu0 0
    %251 = vmatpush1.bf16.msra.mxu0 0
    %252 = vmatprep.subr.bf16.mxu0 0
    %253 = vmatpush1.bf16.msra.mxu0 0
    %254 = vmatprep.subr.bf16.mxu0 0
    %255 = vmatpush1.bf16.msra.mxu0 0
    %256 = vmatprep.subr.bf16.mxu0 0
    %257 = vmatpush1.bf16.msra.mxu0 0
    %258 = vmatprep.subr.bf16.mxu0 0
    %259 = vmatpush1.bf16.msra.mxu0 0
    %260 = vmatprep.subr.bf16.mxu0 0
    %261 = vmatpush1.bf16.msra.mxu0 0
    %262 = vmatprep.mubr.bf16.mxu0 0
    %263 = vmatmul.mubr.bf16.gmra.mrb[0].mxu0 %v185
    %v264 = vpop.f32.mrb[0].mxu0
    %v265 = vadd.f32 %v74, %v264
    %v266 = vpop.f32.mrb[0].mxu0
    %v267 = vadd.f32 %v78, %v266
    %v268 = vpop.f32.mrb[0].mxu0
    %v269 = vadd.f32 %v74, %v268
    %v270 = vpop.f32.mrb[0].mxu0
    %v271 = vadd.f32 %v78, %v270
    %272 = vdwg.mxu0
    %273 = vmatprep.subr.bf16.mxu0 %v156
    %274 = vmatpush1.bf16.msra.mxu0 %v155
    %275 = vmatprep.subr.bf16.mxu0 %v164
    %276 = vmatpush1.bf16.msra.mxu0 %v163
    %277 = vmatprep.subr.bf16.mxu0 0
    %278 = vmatpush1.bf16.msra.mxu0 0
    %279 = vmatprep.subr.bf16.mxu0 0
    %280 = vmatpush1.bf16.msra.mxu0 0
    %281 = vmatprep.subr.bf16.mxu0 0
    %282 = vmatpush1.bf16.msra.mxu0 0
    %283 = vmatprep.subr.bf16.mxu0 0
    %284 = vmatpush1.bf16.msra.mxu0 0
    %285 = vmatprep.subr.bf16.mxu0 0
    %286 = vmatpush1.bf16.msra.mxu0 0
    %287 = vmatprep.subr.bf16.mxu0 0
    %288 = vmatpush1.bf16.msra.mxu0 0
    %289 = vmatprep.subr.bf16.mxu0 0
    %290 = vmatpush1.bf16.msra.mxu0 0
    %291 = vmatprep.subr.bf16.mxu0 0
    %292 = vmatpush1.bf16.msra.mxu0 0
    %293 = vmatprep.subr.bf16.mxu0 0
    %294 = vmatpush1.bf16.msra.mxu0 0
    %295 = vmatprep.subr.bf16.mxu0 0
    %296 = vmatpush1.bf16.msra.mxu0 0
    %297 = vmatprep.subr.bf16.mxu0 0
    %298 = vmatpush1.bf16.msra.mxu0 0
    %299 = vmatprep.subr.bf16.mxu0 0
    %300 = vmatpush1.bf16.msra.mxu0 0
    %301 = vmatprep.subr.bf16.mxu0 0
    %302 = vmatpush1.bf16.msra.mxu0 0
    %303 = vmatprep.subr.bf16.mxu0 0
    %304 = vmatpush1.bf16.msra.mxu0 0
    %305 = vmatprep.mubr.bf16.mxu0 0
    %306 = vmatmul.mubr.bf16.gmra.mrb[0].mxu0 %v185
    %v307 = vpop.f32.mrb[0].mxu0
    %v308 = vadd.f32 %v82, %v307
    %v309 = vpop.f32.mrb[0].mxu0
    %v310 = vadd.f32 %v86, %v309
    %v311 = vpop.f32.mrb[0].mxu0
    %v312 = vadd.f32 %v82, %v311
    %v313 = vpop.f32.mrb[0].mxu0
    %v314 = vadd.f32 %v86, %v313
    %315 = vdwg.mxu0
    %316 = vmatprep.subr.bf16.mxu0 %v158
    %317 = vmatpush1.bf16.msra.mxu0 %v157
    %318 = vmatprep.subr.bf16.mxu0 %v166
    %319 = vmatpush1.bf16.msra.mxu0 %v165
    %320 = vmatprep.subr.bf16.mxu0 0
    %321 = vmatpush1.bf16.msra.mxu0 0
    %322 = vmatprep.subr.bf16.mxu0 0
    %323 = vmatpush1.bf16.msra.mxu0 0
    %324 = vmatprep.subr.bf16.mxu0 0
    %325 = vmatpush1.bf16.msra.mxu0 0
    %326 = vmatprep.subr.bf16.mxu0 0
    %327 = vmatpush1.bf16.msra.mxu0 0
    %328 = vmatprep.subr.bf16.mxu0 0
    %329 = vmatpush1.bf16.msra.mxu0 0
    %330 = vmatprep.subr.bf16.mxu0 0
    %331 = vmatpush1.bf16.msra.mxu0 0
    %332 = vmatprep.subr.bf16.mxu0 0
    %333 = vmatpush1.bf16.msra.mxu0 0
    %334 = vmatprep.subr.bf16.mxu0 0
    %335 = vmatpush1.bf16.msra.mxu0 0
    %336 = vmatprep.subr.bf16.mxu0 0
    %337 = vmatpush1.bf16.msra.mxu0 0
    %338 = vmatprep.subr.bf16.mxu0 0
    %339 = vmatpush1.bf16.msra.mxu0 0
    %340 = vmatprep.subr.bf16.mxu0 0
    %341 = vmatpush1.bf16.msra.mxu0 0
    %342 = vmatprep.subr.bf16.mxu0 0
    %343 = vmatpush1.bf16.msra.mxu0 0
    %344 = vmatprep.subr.bf16.mxu0 0
    %345 = vmatpush1.bf16.msra.mxu0 0
    %346 = vmatprep.subr.bf16.mxu0 0
    %347 = vmatpush1.bf16.msra.mxu0 0
    %348 = vmatprep.mubr.bf16.mxu0 0
    %349 = vmatmul.mubr.bf16.gmra.mrb[0].mxu0 %v185
    %v350 = vpop.f32.mrb[0].mxu0
    %v351 = vadd.f32 %v90, %v350
    %v352 = vpop.f32.mrb[0].mxu0
    %v353 = vadd.f32 %v94, %v352
    %v354 = vpop.f32.mrb[0].mxu0
    %v355 = vadd.f32 %v90, %v354
    %v356 = vpop.f32.mrb[0].mxu0
    %v357 = vadd.f32 %v94, %v356
    %358 = vdwg.mxu0
    %v359 = vmax.f32 %v222, 0.0
    %v360 = vmax.f32 %v224, 0.0
    %v361 = vmax.f32 %v265, 0.0
    %v362 = vmax.f32 %v267, 0.0
    %v363 = vmax.f32 %v308, 0.0
    %v364 = vmax.f32 %v310, 0.0
    %v365 = vmax.f32 %v351, 0.0
    %v366 = vmax.f32 %v353, 0.0
    %v367 = vmax.f32 %v226, 0.0
    %v368 = vmax.f32 %v228, 0.0
    %v369 = vmax.f32 %v269, 0.0
    %v370 = vmax.f32 %v271, 0.0
    %v371 = vmax.f32 %v312, 0.0
    %v372 = vmax.f32 %v314, 0.0
    %v373 = vmax.f32 %v355, 0.0
    %v374 = vmax.f32 %v357, 0.0
    %v375 = vpack.c.bf16 %v367, %v359
    %v376 = vpack.c.bf16 %v368, %v360
    %v377 = vpack.c.bf16 %v369, %v361
    %v378 = vpack.c.bf16 %v370, %v362
    %v379 = vpack.c.bf16 %v371, %v363
    %v380 = vpack.c.bf16 %v372, %v364
    %v381 = vpack.c.bf16 %v373, %v365
    %v382 = vpack.c.bf16 %v374, %v366
    %v383 = vld [vmem:[%s3] sm:$0xff]
    %v384 = vld [vmem:[%s3 + $0x8] sm:$0xff]
    %v385 = vld [vmem:[%s3 + $0x10] sm:$0xff]
    %v386 = vld [vmem:[%s3 + $0x18] sm:$0xff]
    %v387 = vld [vmem:[%s3 + $0x20] sm:$0xff]
    %v388 = vld [vmem:[%s3 + $0x28] sm:$0xff]
    %v389 = vld [vmem:[%s3 + $0x30] sm:$0xff]
    %v390 = vld [vmem:[%s3 + $0x38] sm:$0xff]
    %v391 = vld [vmem:[%s3 + $0x40] sm:$0xff]
    %v392 = vld [vmem:[%s3 + $0x48] sm:$0xff]
    %v393 = vld [vmem:[%s3 + $0x50] sm:$0xff]
    %v394 = vld [vmem:[%s3 + $0x58] sm:$0xff]
    %v395 = vld [vmem:[%s3 + $0x60] sm:$0xff]
    %v396 = vld [vmem:[%s3 + $0x68] sm:$0xff]
    %v397 = vld [vmem:[%s3 + $0x70] sm:$0xff]
    %v398 = vld [vmem:[%s3 + $0x78] sm:$0xff]
    %v399 = vld [vmem:[%s3 + $0x80] sm:$0xff]
    %v400 = vld [vmem:[%s3 + $0x88] sm:$0xff]
    %v401 = vld [vmem:[%s3 + $0x90] sm:$0xff]
    %v402 = vld [vmem:[%s3 + $0x98] sm:$0xff]
    %v403 = vld [vmem:[%s3 + $0xa0] sm:$0xff]
    %v404 = vld [vmem:[%s3 + $0xa8] sm:$0xff]
    %v405 = vld [vmem:[%s3 + $0xb0] sm:$0xff]
    %v406 = vld [vmem:[%s3 + $0xb8] sm:$0xff]
    %v407 = vld [vmem:[%s3 + $0xc0] sm:$0xff]
    %v408 = vld [vmem:[%s3 + $0xc8] sm:$0xff]
    %v409 = vld [vmem:[%s3 + $0xd0] sm:$0xff]
    %v410 = vld [vmem:[%s3 + $0xd8] sm:$0xff]
    %v411 = vld [vmem:[%s3 + $0xe0] sm:$0xff]
    %v412 = vld [vmem:[%s3 + $0xe8] sm:$0xff]
    %v413 = vld [vmem:[%s3 + $0xf0] sm:$0xff]
    %v414 = vld [vmem:[%s3 + $0xf8] sm:$0xff]
    %v415 = vld [vmem:[%s3 + $0x100] sm:$0xff]
    %v416 = vld [vmem:[%s3 + $0x108] sm:$0xff]
    %v417 = vld [vmem:[%s3 + $0x110] sm:$0xff]
    %v418 = vld [vmem:[%s3 + $0x118] sm:$0xff]
    %v419 = vld [vmem:[%s3 + $0x120] sm:$0xff]
    %v420 = vld [vmem:[%s3 + $0x128] sm:$0xff]
    %v421 = vld [vmem:[%s3 + $0x130] sm:$0xff]
    %v422 = vld [vmem:[%s3 + $0x138] sm:$0xff]
    %v423 = vld [vmem:[%s3 + $0x140] sm:$0xff]
    %v424 = vld [vmem:[%s3 + $0x148] sm:$0xff]
    %v425 = vld [vmem:[%s3 + $0x150] sm:$0xff]
    %v426 = vld [vmem:[%s3 + $0x158] sm:$0xff]
    %v427 = vld [vmem:[%s3 + $0x160] sm:$0xff]
    %v428 = vld [vmem:[%s3 + $0x168] sm:$0xff]
    %v429 = vld [vmem:[%s3 + $0x170] sm:$0xff]
    %v430 = vld [vmem:[%s3 + $0x178] sm:$0xff]
    %v431 = vld [vmem:[%s3 + $0x180] sm:$0xff]
    %v432 = vld [vmem:[%s3 + $0x188] sm:$0xff]
    %v433 = vld [vmem:[%s3 + $0x190] sm:$0xff]
    %v434 = vld [vmem:[%s3 + $0x198] sm:$0xff]
    %v435 = vld [vmem:[%s3 + $0x1a0] sm:$0xff]
    %v436 = vld [vmem:[%s3 + $0x1a8] sm:$0xff]
    %v437 = vld [vmem:[%s3 + $0x1b0] sm:$0xff]
    %v438 = vld [vmem:[%s3 + $0x1b8] sm:$0xff]
    %v439 = vld [vmem:[%s3 + $0x1c0] sm:$0xff]
    %v440 = vld [vmem:[%s3 + $0x1c8] sm:$0xff]
    %v441 = vld [vmem:[%s3 + $0x1d0] sm:$0xff]
    %v442 = vld [vmem:[%s3 + $0x1d8] sm:$0xff]
    %v443 = vld [vmem:[%s3 + $0x1e0] sm:$0xff]
    %v444 = vld [vmem:[%s3 + $0x1e8] sm:$0xff]
    %v445 = vld [vmem:[%s3 + $0x1f0] sm:$0xff]
    %v446 = vld [vmem:[%s3 + $0x1f8] sm:$0xff]
    %v447 = vld [vmem:[%s3 + $0x200] sm:$0xff]
    %v448 = vld [vmem:[%s3 + $0x208] sm:$0xff]
    %v449 = vld [vmem:[%s3 + $0x210] sm:$0xff]
    %v450 = vld [vmem:[%s3 + $0x218] sm:$0xff]
    %v451 = vld [vmem:[%s3 + $0x220] sm:$0xff]
    %v452 = vld [vmem:[%s3 + $0x228] sm:$0xff]
    %v453 = vld [vmem:[%s3 + $0x230] sm:$0xff]
    %v454 = vld [vmem:[%s3 + $0x238] sm:$0xff]
    %v455 = vld [vmem:[%s3 + $0x240] sm:$0xff]
    %v456 = vld [vmem:[%s3 + $0x248] sm:$0xff]
    %v457 = vld [vmem:[%s3 + $0x250] sm:$0xff]
    %v458 = vld [vmem:[%s3 + $0x258] sm:$0xff]
    %v459 = vld [vmem:[%s3 + $0x260] sm:$0xff]
    %v460 = vld [vmem:[%s3 + $0x268] sm:$0xff]
    %v461 = vld [vmem:[%s3 + $0x270] sm:$0xff]
    %v462 = vld [vmem:[%s3 + $0x278] sm:$0xff]
    %v463 = vld [vmem:[%s3 + $0x280] sm:$0xff]
    %v464 = vld [vmem:[%s3 + $0x288] sm:$0xff]
    %v465 = vld [vmem:[%s3 + $0x290] sm:$0xff]
    %v466 = vld [vmem:[%s3 + $0x298] sm:$0xff]
    %v467 = vld [vmem:[%s3 + $0x2a0] sm:$0xff]
    %v468 = vld [vmem:[%s3 + $0x2a8] sm:$0xff]
    %v469 = vld [vmem:[%s3 + $0x2b0] sm:$0xff]
    %v470 = vld [vmem:[%s3 + $0x2b8] sm:$0xff]
    %v471 = vld [vmem:[%s3 + $0x2c0] sm:$0xff]
    %v472 = vld [vmem:[%s3 + $0x2c8] sm:$0xff]
    %v473 = vld [vmem:[%s3 + $0x2d0] sm:$0xff]
    %v474 = vld [vmem:[%s3 + $0x2d8] sm:$0xff]
    %v475 = vld [vmem:[%s3 + $0x2e0] sm:$0xff]
    %v476 = vld [vmem:[%s3 + $0x2e8] sm:$0xff]
    %v477 = vld [vmem:[%s3 + $0x2f0] sm:$0xff]
    %v478 = vld [vmem:[%s3 + $0x2f8] sm:$0xff]
    %v479 = vld [vmem:[%s3 + $0x300] sm:$0xff]
    %v480 = vld [vmem:[%s3 + $0x308] sm:$0xff]
    %v481 = vld [vmem:[%s3 + $0x310] sm:$0xff]
    %v482 = vld [vmem:[%s3 + $0x318] sm:$0xff]
    %v483 = vld [vmem:[%s3 + $0x320] sm:$0xff]
    %v484 = vld [vmem:[%s3 + $0x328] sm:$0xff]
    %v485 = vld [vmem:[%s3 + $0x330] sm:$0xff]
    %v486 = vld [vmem:[%s3 + $0x338] sm:$0xff]
    %v487 = vld [vmem:[%s3 + $0x340] sm:$0xff]
    %v488 = vld [vmem:[%s3 + $0x348] sm:$0xff]
    %v489 = vld [vmem:[%s3 + $0x350] sm:$0xff]
    %v490 = vld [vmem:[%s3 + $0x358] sm:$0xff]
    %v491 = vld [vmem:[%s3 + $0x360] sm:$0xff]
    %v492 = vld [vmem:[%s3 + $0x368] sm:$0xff]
    %v493 = vld [vmem:[%s3 + $0x370] sm:$0xff]
    %v494 = vld [vmem:[%s3 + $0x378] sm:$0xff]
    %v495 = vld [vmem:[%s3 + $0x380] sm:$0xff]
    %v496 = vld [vmem:[%s3 + $0x388] sm:$0xff]
    %v497 = vld [vmem:[%s3 + $0x390] sm:$0xff]
    %v498 = vld [vmem:[%s3 + $0x398] sm:$0xff]
    %v499 = vld [vmem:[%s3 + $0x3a0] sm:$0xff]
    %v500 = vld [vmem:[%s3 + $0x3a8] sm:$0xff]
    %v501 = vld [vmem:[%s3 + $0x3b0] sm:$0xff]
    %v502 = vld [vmem:[%s3 + $0x3b8] sm:$0xff]
    %v503 = vld [vmem:[%s3 + $0x3c0] sm:$0xff]
    %v504 = vld [vmem:[%s3 + $0x3c8] sm:$0xff]
    %v505 = vld [vmem:[%s3 + $0x3d0] sm:$0xff]
    %v506 = vld [vmem:[%s3 + $0x3d8] sm:$0xff]
    %v507 = vld [vmem:[%s3 + $0x3e0] sm:$0xff]
    %v508 = vld [vmem:[%s3 + $0x3e8] sm:$0xff]
    %v509 = vld [vmem:[%s3 + $0x3f0] sm:$0xff]
    %v510 = vld [vmem:[%s3 + $0x3f8] sm:$0xff]
    %v511 = vld [vmem:[%s3 + $0x400] sm:$0xff]
    %v512 = vld [vmem:[%s3 + $0x408] sm:$0xff]
    %v513 = vld [vmem:[%s3 + $0x410] sm:$0xff]
    %v514 = vld [vmem:[%s3 + $0x418] sm:$0xff]
    %v515 = vld [vmem:[%s3 + $0x420] sm:$0xff]
    %v516 = vld [vmem:[%s3 + $0x428] sm:$0xff]
    %v517 = vld [vmem:[%s3 + $0x430] sm:$0xff]
    %v518 = vld [vmem:[%s3 + $0x438] sm:$0xff]
    %v519 = vld [vmem:[%s3 + $0x440] sm:$0xff]
    %v520 = vld [vmem:[%s3 + $0x448] sm:$0xff]
    %v521 = vld [vmem:[%s3 + $0x450] sm:$0xff]
    %v522 = vld [vmem:[%s3 + $0x458] sm:$0xff]
    %v523 = vld [vmem:[%s3 + $0x460] sm:$0xff]
    %v524 = vld [vmem:[%s3 + $0x468] sm:$0xff]
    %v525 = vld [vmem:[%s3 + $0x470] sm:$0xff]
    %v526 = vld [vmem:[%s3 + $0x478] sm:$0xff]
    %v527 = vld [vmem:[%s3 + $0x480] sm:$0xff]
    %v528 = vld [vmem:[%s3 + $0x488] sm:$0xff]
    %v529 = vld [vmem:[%s3 + $0x490] sm:$0xff]
    %v530 = vld [vmem:[%s3 + $0x498] sm:$0xff]
    %v531 = vld [vmem:[%s3 + $0x4a0] sm:$0xff]
    %v532 = vld [vmem:[%s3 + $0x4a8] sm:$0xff]
    %v533 = vld [vmem:[%s3 + $0x4b0] sm:$0xff]
    %v534 = vld [vmem:[%s3 + $0x4b8] sm:$0xff]
    %v535 = vld [vmem:[%s3 + $0x4c0] sm:$0xff]
    %v536 = vld [vmem:[%s3 + $0x4c8] sm:$0xff]
    %v537 = vld [vmem:[%s3 + $0x4d0] sm:$0xff]
    %v538 = vld [vmem:[%s3 + $0x4d8] sm:$0xff]
    %v539 = vld [vmem:[%s3 + $0x4e0] sm:$0xff]
    %v540 = vld [vmem:[%s3 + $0x4e8] sm:$0xff]
    %v541 = vld [vmem:[%s3 + $0x4f0] sm:$0xff]
    %v542 = vld [vmem:[%s3 + $0x4f8] sm:$0xff]
    %v543 = vld [vmem:[%s3 + $0x500] sm:$0xff]
    %v544 = vld [vmem:[%s3 + $0x508] sm:$0xff]
    %v545 = vld [vmem:[%s3 + $0x510] sm:$0xff]
    %v546 = vld [vmem:[%s3 + $0x518] sm:$0xff]
    %v547 = vld [vmem:[%s3 + $0x520] sm:$0xff]
    %v548 = vld [vmem:[%s3 + $0x528] sm:$0xff]
    %v549 = vld [vmem:[%s3 + $0x530] sm:$0xff]
    %v550 = vld [vmem:[%s3 + $0x538] sm:$0xff]
    %v551 = vld [vmem:[%s3 + $0x540] sm:$0xff]
    %v552 = vld [vmem:[%s3 + $0x548] sm:$0xff]
    %v553 = vld [vmem:[%s3 + $0x550] sm:$0xff]
    %v554 = vld [vmem:[%s3 + $0x558] sm:$0xff]
    %v555 = vld [vmem:[%s3 + $0x560] sm:$0xff]
    %v556 = vld [vmem:[%s3 + $0x568] sm:$0xff]
    %v557 = vld [vmem:[%s3 + $0x570] sm:$0xff]
    %v558 = vld [vmem:[%s3 + $0x578] sm:$0xff]
    %v559 = vld [vmem:[%s3 + $0x580] sm:$0xff]
    %v560 = vld [vmem:[%s3 + $0x588] sm:$0xff]
    %v561 = vld [vmem:[%s3 + $0x590] sm:$0xff]
    %v562 = vld [vmem:[%s3 + $0x598] sm:$0xff]
    %v563 = vld [vmem:[%s3 + $0x5a0] sm:$0xff]
    %v564 = vld [vmem:[%s3 + $0x5a8] sm:$0xff]
    %v565 = vld [vmem:[%s3 + $0x5b0] sm:$0xff]
    %v566 = vld [vmem:[%s3 + $0x5b8] sm:$0xff]
    %v567 = vld [vmem:[%s3 + $0x5c0] sm:$0xff]
    %v568 = vld [vmem:[%s3 + $0x5c8] sm:$0xff]
    %v569 = vld [vmem:[%s3 + $0x5d0] sm:$0xff]
    %v570 = vld [vmem:[%s3 + $0x5d8] sm:$0xff]
    %v571 = vld [vmem:[%s3 + $0x5e0] sm:$0xff]
    %v572 = vld [vmem:[%s3 + $0x5e8] sm:$0xff]
    %v573 = vld [vmem:[%s3 + $0x5f0] sm:$0xff]
    %v574 = vld [vmem:[%s3 + $0x5f8] sm:$0xff]
    %v575 = vld [vmem:[%s3 + $0x600] sm:$0xff]
    %v576 = vld [vmem:[%s3 + $0x608] sm:$0xff]
    %v577 = vld [vmem:[%s3 + $0x610] sm:$0xff]
    %v578 = vld [vmem:[%s3 + $0x618] sm:$0xff]
    %v579 = vld [vmem:[%s3 + $0x620] sm:$0xff]
    %v580 = vld [vmem:[%s3 + $0x628] sm:$0xff]
    %v581 = vld [vmem:[%s3 + $0x630] sm:$0xff]
    %v582 = vld [vmem:[%s3 + $0x638] sm:$0xff]
    %v583 = vld [vmem:[%s3 + $0x640] sm:$0xff]
    %v584 = vld [vmem:[%s3 + $0x648] sm:$0xff]
    %v585 = vld [vmem:[%s3 + $0x650] sm:$0xff]
    %v586 = vld [vmem:[%s3 + $0x658] sm:$0xff]
    %v587 = vld [vmem:[%s3 + $0x660] sm:$0xff]
    %v588 = vld [vmem:[%s3 + $0x668] sm:$0xff]
    %v589 = vld [vmem:[%s3 + $0x670] sm:$0xff]
    %v590 = vld [vmem:[%s3 + $0x678] sm:$0xff]
    %v591 = vld [vmem:[%s3 + $0x680] sm:$0xff]
    %v592 = vld [vmem:[%s3 + $0x688] sm:$0xff]
    %v593 = vld [vmem:[%s3 + $0x690] sm:$0xff]
    %v594 = vld [vmem:[%s3 + $0x698] sm:$0xff]
    %v595 = vld [vmem:[%s3 + $0x6a0] sm:$0xff]
    %v596 = vld [vmem:[%s3 + $0x6a8] sm:$0xff]
    %v597 = vld [vmem:[%s3 + $0x6b0] sm:$0xff]
    %v598 = vld [vmem:[%s3 + $0x6b8] sm:$0xff]
    %v599 = vld [vmem:[%s3 + $0x6c0] sm:$0xff]
    %v600 = vld [vmem:[%s3 + $0x6c8] sm:$0xff]
    %v601 = vld [vmem:[%s3 + $0x6d0] sm:$0xff]
    %v602 = vld [vmem:[%s3 + $0x6d8] sm:$0xff]
    %v603 = vld [vmem:[%s3 + $0x6e0] sm:$0xff]
    %v604 = vld [vmem:[%s3 + $0x6e8] sm:$0xff]
    %v605 = vld [vmem:[%s3 + $0x6f0] sm:$0xff]
    %v606 = vld [vmem:[%s3 + $0x6f8] sm:$0xff]
    %v607 = vld [vmem:[%s3 + $0x700] sm:$0xff]
    %v608 = vld [vmem:[%s3 + $0x708] sm:$0xff]
    %v609 = vld [vmem:[%s3 + $0x710] sm:$0xff]
    %v610 = vld [vmem:[%s3 + $0x718] sm:$0xff]
    %v611 = vld [vmem:[%s3 + $0x720] sm:$0xff]
    %v612 = vld [vmem:[%s3 + $0x728] sm:$0xff]
    %v613 = vld [vmem:[%s3 + $0x730] sm:$0xff]
    %v614 = vld [vmem:[%s3 + $0x738] sm:$0xff]
    %v615 = vld [vmem:[%s3 + $0x740] sm:$0xff]
    %v616 = vld [vmem:[%s3 + $0x748] sm:$0xff]
    %v617 = vld [vmem:[%s3 + $0x750] sm:$0xff]
    %v618 = vld [vmem:[%s3 + $0x758] sm:$0xff]
    %v619 = vld [vmem:[%s3 + $0x760] sm:$0xff]
    %v620 = vld [vmem:[%s3 + $0x768] sm:$0xff]
    %v621 = vld [vmem:[%s3 + $0x770] sm:$0xff]
    %v622 = vld [vmem:[%s3 + $0x778] sm:$0xff]
    %v623 = vld [vmem:[%s3 + $0x780] sm:$0xff]
    %v624 = vld [vmem:[%s3 + $0x788] sm:$0xff]
    %v625 = vld [vmem:[%s3 + $0x790] sm:$0xff]
    %v626 = vld [vmem:[%s3 + $0x798] sm:$0xff]
    %v627 = vld [vmem:[%s3 + $0x7a0] sm:$0xff]
    %v628 = vld [vmem:[%s3 + $0x7a8] sm:$0xff]
    %v629 = vld [vmem:[%s3 + $0x7b0] sm:$0xff]
    %v630 = vld [vmem:[%s3 + $0x7b8] sm:$0xff]
    %v631 = vld [vmem:[%s3 + $0x7c0] sm:$0xff]
    %v632 = vld [vmem:[%s3 + $0x7c8] sm:$0xff]
    %v633 = vld [vmem:[%s3 + $0x7d0] sm:$0xff]
    %v634 = vld [vmem:[%s3 + $0x7d8] sm:$0xff]
    %v635 = vld [vmem:[%s3 + $0x7e0] sm:$0xff]
    %v636 = vld [vmem:[%s3 + $0x7e8] sm:$0xff]
    %v637 = vld [vmem:[%s3 + $0x7f0] sm:$0xff]
    %v638 = vld [vmem:[%s3 + $0x7f8] sm:$0xff]
    %v639 = vld [vmem:[%s4] sm:$0xf]
    %v641 = vlaneseq
    %v642 = vshrl.u32 %v641, 7
    %v643 = vsub.s32 0, %v642
    %v644 = vrot.slane %v639, %v643
    %v645 = vlaneseq
    %v646 = vshrl.u32 %v645, 7
    %v647 = vsub.s32 1, %v646
    %v648 = vrot.slane %v639, %v647
    %v649 = vlaneseq
    %v650 = vshrl.u32 %v649, 7
    %v651 = vsub.s32 2, %v650
    %v652 = vrot.slane %v639, %v651
    %v653 = vlaneseq
    %v654 = vshrl.u32 %v653, 7
    %v655 = vsub.s32 3, %v654
    %v656 = vrot.slane %v639, %v655
    %v917 = vunpack.c.l.b16 %v383
    %v918 = vunpack.c.h.b16 %v383
    %v919 = vunpack.c.l.b16 %v384
    %v920 = vunpack.c.h.b16 %v384
    %v921 = vunpack.c.l.b16 %v385
    %v922 = vunpack.c.h.b16 %v385
    %v923 = vunpack.c.l.b16 %v386
    %v924 = vunpack.c.h.b16 %v386
    %v925 = vunpack.c.l.b16 %v387
    %v926 = vunpack.c.h.b16 %v387
    %v927 = vunpack.c.l.b16 %v388
    %v928 = vunpack.c.h.b16 %v388
    %v929 = vunpack.c.l.b16 %v389
    %v930 = vunpack.c.h.b16 %v389
    %v931 = vunpack.c.l.b16 %v390
    %v932 = vunpack.c.h.b16 %v390
    %v933 = vunpack.c.l.b16 %v391
    %v934 = vunpack.c.h.b16 %v391
    %v935 = vunpack.c.l.b16 %v392
    %v936 = vunpack.c.h.b16 %v392
    %v937 = vunpack.c.l.b16 %v393
    %v938 = vunpack.c.h.b16 %v393
    %v939 = vunpack.c.l.b16 %v394
    %v940 = vunpack.c.h.b16 %v394
    %v941 = vunpack.c.l.b16 %v395
    %v942 = vunpack.c.h.b16 %v395
    %v943 = vunpack.c.l.b16 %v396
    %v944 = vunpack.c.h.b16 %v396
    %v945 = vunpack.c.l.b16 %v397
    %v946 = vunpack.c.h.b16 %v397
    %v947 = vunpack.c.l.b16 %v398
    %v948 = vunpack.c.h.b16 %v398
    %v949 = vunpack.c.l.b16 %v399
    %v950 = vunpack.c.h.b16 %v399
    %v951 = vunpack.c.l.b16 %v400
    %v952 = vunpack.c.h.b16 %v400
    %v953 = vunpack.c.l.b16 %v401
    %v954 = vunpack.c.h.b16 %v401
    %v955 = vunpack.c.l.b16 %v402
    %v956 = vunpack.c.h.b16 %v402
    %v957 = vunpack.c.l.b16 %v403
    %v958 = vunpack.c.h.b16 %v403
    %v959 = vunpack.c.l.b16 %v404
    %v960 = vunpack.c.h.b16 %v404
    %v961 = vunpack.c.l.b16 %v405
    %v962 = vunpack.c.h.b16 %v405
    %v963 = vunpack.c.l.b16 %v406
    %v964 = vunpack.c.h.b16 %v406
    %v965 = vunpack.c.l.b16 %v407
    %v966 = vunpack.c.h.b16 %v407
    %v967 = vunpack.c.l.b16 %v408
    %v968 = vunpack.c.h.b16 %v408
    %v969 = vunpack.c.l.b16 %v409
    %v970 = vunpack.c.h.b16 %v409
    %v971 = vunpack.c.l.b16 %v410
    %v972 = vunpack.c.h.b16 %v410
    %v973 = vunpack.c.l.b16 %v411
    %v974 = vunpack.c.h.b16 %v411
    %v975 = vunpack.c.l.b16 %v412
    %v976 = vunpack.c.h.b16 %v412
    %v977 = vunpack.c.l.b16 %v413
    %v978 = vunpack.c.h.b16 %v413
    %v979 = vunpack.c.l.b16 %v414
    %v980 = vunpack.c.h.b16 %v414
    %v981 = vunpack.c.l.b16 %v415
    %v982 = vunpack.c.h.b16 %v415
    %v983 = vunpack.c.l.b16 %v416
    %v984 = vunpack.c.h.b16 %v416
    %v985 = vunpack.c.l.b16 %v417
    %v986 = vunpack.c.h.b16 %v417
    %v987 = vunpack.c.l.b16 %v418
    %v988 = vunpack.c.h.b16 %v418
    %v989 = vunpack.c.l.b16 %v419
    %v990 = vunpack.c.h.b16 %v419
    %v991 = vunpack.c.l.b16 %v420
    %v992 = vunpack.c.h.b16 %v420
    %v993 = vunpack.c.l.b16 %v421
    %v994 = vunpack.c.h.b16 %v421
    %v995 = vunpack.c.l.b16 %v422
    %v996 = vunpack.c.h.b16 %v422
    %v997 = vunpack.c.l.b16 %v423
    %v998 = vunpack.c.h.b16 %v423
    %v999 = vunpack.c.l.b16 %v424
    %v1000 = vunpack.c.h.b16 %v424
    %v1001 = vunpack.c.l.b16 %v425
    %v1002 = vunpack.c.h.b16 %v425
    %v1003 = vunpack.c.l.b16 %v426
    %v1004 = vunpack.c.h.b16 %v426
    %v1005 = vunpack.c.l.b16 %v427
    %v1006 = vunpack.c.h.b16 %v427
    %v1007 = vunpack.c.l.b16 %v428
    %v1008 = vunpack.c.h.b16 %v428
    %v1009 = vunpack.c.l.b16 %v429
    %v1010 = vunpack.c.h.b16 %v429
    %v1011 = vunpack.c.l.b16 %v430
    %v1012 = vunpack.c.h.b16 %v430
    %v1013 = vunpack.c.l.b16 %v431
    %v1014 = vunpack.c.h.b16 %v431
    %v1015 = vunpack.c.l.b16 %v432
    %v1016 = vunpack.c.h.b16 %v432
    %v1017 = vunpack.c.l.b16 %v433
    %v1018 = vunpack.c.h.b16 %v433
    %v1019 = vunpack.c.l.b16 %v434
    %v1020 = vunpack.c.h.b16 %v434
    %v1021 = vunpack.c.l.b16 %v435
    %v1022 = vunpack.c.h.b16 %v435
    %v1023 = vunpack.c.l.b16 %v436
    %v1024 = vunpack.c.h.b16 %v436
    %v1025 = vunpack.c.l.b16 %v437
    %v1026 = vunpack.c.h.b16 %v437
    %v1027 = vunpack.c.l.b16 %v438
    %v1028 = vunpack.c.h.b16 %v438
    %v1029 = vunpack.c.l.b16 %v439
    %v1030 = vunpack.c.h.b16 %v439
    %v1031 = vunpack.c.l.b16 %v440
    %v1032 = vunpack.c.h.b16 %v440
    %v1033 = vunpack.c.l.b16 %v441
    %v1034 = vunpack.c.h.b16 %v441
    %v1035 = vunpack.c.l.b16 %v442
    %v1036 = vunpack.c.h.b16 %v442
    %v1037 = vunpack.c.l.b16 %v443
    %v1038 = vunpack.c.h.b16 %v443
    %v1039 = vunpack.c.l.b16 %v444
    %v1040 = vunpack.c.h.b16 %v444
    %v1041 = vunpack.c.l.b16 %v445
    %v1042 = vunpack.c.h.b16 %v445
    %v1043 = vunpack.c.l.b16 %v446
    %v1044 = vunpack.c.h.b16 %v446
    %v1045 = vunpack.c.l.b16 %v447
    %v1046 = vunpack.c.h.b16 %v447
    %v1047 = vunpack.c.l.b16 %v448
    %v1048 = vunpack.c.h.b16 %v448
    %v1049 = vunpack.c.l.b16 %v449
    %v1050 = vunpack.c.h.b16 %v449
    %v1051 = vunpack.c.l.b16 %v450
    %v1052 = vunpack.c.h.b16 %v450
    %v1053 = vunpack.c.l.b16 %v451
    %v1054 = vunpack.c.h.b16 %v451
    %v1055 = vunpack.c.l.b16 %v452
    %v1056 = vunpack.c.h.b16 %v452
    %v1057 = vunpack.c.l.b16 %v453
    %v1058 = vunpack.c.h.b16 %v453
    %v1059 = vunpack.c.l.b16 %v454
    %v1060 = vunpack.c.h.b16 %v454
    %v1061 = vunpack.c.l.b16 %v455
    %v1062 = vunpack.c.h.b16 %v455
    %v1063 = vunpack.c.l.b16 %v456
    %v1064 = vunpack.c.h.b16 %v456
    %v1065 = vunpack.c.l.b16 %v457
    %v1066 = vunpack.c.h.b16 %v457
    %v1067 = vunpack.c.l.b16 %v458
    %v1068 = vunpack.c.h.b16 %v458
    %v1069 = vunpack.c.l.b16 %v459
    %v1070 = vunpack.c.h.b16 %v459
    %v1071 = vunpack.c.l.b16 %v460
    %v1072 = vunpack.c.h.b16 %v460
    %v1073 = vunpack.c.l.b16 %v461
    %v1074 = vunpack.c.h.b16 %v461
    %v1075 = vunpack.c.l.b16 %v462
    %v1076 = vunpack.c.h.b16 %v462
    %v1077 = vunpack.c.l.b16 %v463
    %v1078 = vunpack.c.h.b16 %v463
    %v1079 = vunpack.c.l.b16 %v464
    %v1080 = vunpack.c.h.b16 %v464
    %v1081 = vunpack.c.l.b16 %v465
    %v1082 = vunpack.c.h.b16 %v465
    %v1083 = vunpack.c.l.b16 %v466
    %v1084 = vunpack.c.h.b16 %v466
    %v1085 = vunpack.c.l.b16 %v467
    %v1086 = vunpack.c.h.b16 %v467
    %v1087 = vunpack.c.l.b16 %v468
    %v1088 = vunpack.c.h.b16 %v468
    %v1089 = vunpack.c.l.b16 %v469
    %v1090 = vunpack.c.h.b16 %v469
    %v1091 = vunpack.c.l.b16 %v470
    %v1092 = vunpack.c.h.b16 %v470
    %v1093 = vunpack.c.l.b16 %v471
    %v1094 = vunpack.c.h.b16 %v471
    %v1095 = vunpack.c.l.b16 %v472
    %v1096 = vunpack.c.h.b16 %v472
    %v1097 = vunpack.c.l.b16 %v473
    %v1098 = vunpack.c.h.b16 %v473
    %v1099 = vunpack.c.l.b16 %v474
    %v1100 = vunpack.c.h.b16 %v474
    %v1101 = vunpack.c.l.b16 %v475
    %v1102 = vunpack.c.h.b16 %v475
    %v1103 = vunpack.c.l.b16 %v476
    %v1104 = vunpack.c.h.b16 %v476
    %v1105 = vunpack.c.l.b16 %v477
    %v1106 = vunpack.c.h.b16 %v477
    %v1107 = vunpack.c.l.b16 %v478
    %v1108 = vunpack.c.h.b16 %v478
    %v1109 = vunpack.c.l.b16 %v479
    %v1110 = vunpack.c.h.b16 %v479
    %v1111 = vunpack.c.l.b16 %v480
    %v1112 = vunpack.c.h.b16 %v480
    %v1113 = vunpack.c.l.b16 %v481
    %v1114 = vunpack.c.h.b16 %v481
    %v1115 = vunpack.c.l.b16 %v482
    %v1116 = vunpack.c.h.b16 %v482
    %v1117 = vunpack.c.l.b16 %v483
    %v1118 = vunpack.c.h.b16 %v483
    %v1119 = vunpack.c.l.b16 %v484
    %v1120 = vunpack.c.h.b16 %v484
    %v1121 = vunpack.c.l.b16 %v485
    %v1122 = vunpack.c.h.b16 %v485
    %v1123 = vunpack.c.l.b16 %v486
    %v1124 = vunpack.c.h.b16 %v486
    %v1125 = vunpack.c.l.b16 %v487
    %v1126 = vunpack.c.h.b16 %v487
    %v1127 = vunpack.c.l.b16 %v488
    %v1128 = vunpack.c.h.b16 %v488
    %v1129 = vunpack.c.l.b16 %v489
    %v1130 = vunpack.c.h.b16 %v489
    %v1131 = vunpack.c.l.b16 %v490
    %v1132 = vunpack.c.h.b16 %v490
    %v1133 = vunpack.c.l.b16 %v491
    %v1134 = vunpack.c.h.b16 %v491
    %v1135 = vunpack.c.l.b16 %v492
    %v1136 = vunpack.c.h.b16 %v492
    %v1137 = vunpack.c.l.b16 %v493
    %v1138 = vunpack.c.h.b16 %v493
    %v1139 = vunpack.c.l.b16 %v494
    %v1140 = vunpack.c.h.b16 %v494
    %v1141 = vunpack.c.l.b16 %v495
    %v1142 = vunpack.c.h.b16 %v495
    %v1143 = vunpack.c.l.b16 %v496
    %v1144 = vunpack.c.h.b16 %v496
    %v1145 = vunpack.c.l.b16 %v497
    %v1146 = vunpack.c.h.b16 %v497
    %v1147 = vunpack.c.l.b16 %v498
    %v1148 = vunpack.c.h.b16 %v498
    %v1149 = vunpack.c.l.b16 %v499
    %v1150 = vunpack.c.h.b16 %v499
    %v1151 = vunpack.c.l.b16 %v500
    %v1152 = vunpack.c.h.b16 %v500
    %v1153 = vunpack.c.l.b16 %v501
    %v1154 = vunpack.c.h.b16 %v501
    %v1155 = vunpack.c.l.b16 %v502
    %v1156 = vunpack.c.h.b16 %v502
    %v1157 = vunpack.c.l.b16 %v503
    %v1158 = vunpack.c.h.b16 %v503
    %v1159 = vunpack.c.l.b16 %v504
    %v1160 = vunpack.c.h.b16 %v504
    %v1161 = vunpack.c.l.b16 %v505
    %v1162 = vunpack.c.h.b16 %v505
    %v1163 = vunpack.c.l.b16 %v506
    %v1164 = vunpack.c.h.b16 %v506
    %v1165 = vunpack.c.l.b16 %v507
    %v1166 = vunpack.c.h.b16 %v507
    %v1167 = vunpack.c.l.b16 %v508
    %v1168 = vunpack.c.h.b16 %v508
    %v1169 = vunpack.c.l.b16 %v509
    %v1170 = vunpack.c.h.b16 %v509
    %v1171 = vunpack.c.l.b16 %v510
    %v1172 = vunpack.c.h.b16 %v510
    %v1173 = vunpack.c.l.b16 %v511
    %v1174 = vunpack.c.h.b16 %v511
    %v1175 = vunpack.c.l.b16 %v512
    %v1176 = vunpack.c.h.b16 %v512
    %v1177 = vunpack.c.l.b16 %v513
    %v1178 = vunpack.c.h.b16 %v513
    %v1179 = vunpack.c.l.b16 %v514
    %v1180 = vunpack.c.h.b16 %v514
    %v1181 = vunpack.c.l.b16 %v515
    %v1182 = vunpack.c.h.b16 %v515
    %v1183 = vunpack.c.l.b16 %v516
    %v1184 = vunpack.c.h.b16 %v516
    %v1185 = vunpack.c.l.b16 %v517
    %v1186 = vunpack.c.h.b16 %v517
    %v1187 = vunpack.c.l.b16 %v518
    %v1188 = vunpack.c.h.b16 %v518
    %v1189 = vunpack.c.l.b16 %v519
    %v1190 = vunpack.c.h.b16 %v519
    %v1191 = vunpack.c.l.b16 %v520
    %v1192 = vunpack.c.h.b16 %v520
    %v1193 = vunpack.c.l.b16 %v521
    %v1194 = vunpack.c.h.b16 %v521
    %v1195 = vunpack.c.l.b16 %v522
    %v1196 = vunpack.c.h.b16 %v522
    %v1197 = vunpack.c.l.b16 %v523
    %v1198 = vunpack.c.h.b16 %v523
    %v1199 = vunpack.c.l.b16 %v524
    %v1200 = vunpack.c.h.b16 %v524
    %v1201 = vunpack.c.l.b16 %v525
    %v1202 = vunpack.c.h.b16 %v525
    %v1203 = vunpack.c.l.b16 %v526
    %v1204 = vunpack.c.h.b16 %v526
    %v1205 = vunpack.c.l.b16 %v527
    %v1206 = vunpack.c.h.b16 %v527
    %v1207 = vunpack.c.l.b16 %v528
    %v1208 = vunpack.c.h.b16 %v528
    %v1209 = vunpack.c.l.b16 %v529
    %v1210 = vunpack.c.h.b16 %v529
    %v1211 = vunpack.c.l.b16 %v530
    %v1212 = vunpack.c.h.b16 %v530
    %v1213 = vunpack.c.l.b16 %v531
    %v1214 = vunpack.c.h.b16 %v531
    %v1215 = vunpack.c.l.b16 %v532
    %v1216 = vunpack.c.h.b16 %v532
    %v1217 = vunpack.c.l.b16 %v533
    %v1218 = vunpack.c.h.b16 %v533
    %v1219 = vunpack.c.l.b16 %v534
    %v1220 = vunpack.c.h.b16 %v534
    %v1221 = vunpack.c.l.b16 %v535
    %v1222 = vunpack.c.h.b16 %v535
    %v1223 = vunpack.c.l.b16 %v536
    %v1224 = vunpack.c.h.b16 %v536
    %v1225 = vunpack.c.l.b16 %v537
    %v1226 = vunpack.c.h.b16 %v537
    %v1227 = vunpack.c.l.b16 %v538
    %v1228 = vunpack.c.h.b16 %v538
    %v1229 = vunpack.c.l.b16 %v539
    %v1230 = vunpack.c.h.b16 %v539
    %v1231 = vunpack.c.l.b16 %v540
    %v1232 = vunpack.c.h.b16 %v540
    %v1233 = vunpack.c.l.b16 %v541
    %v1234 = vunpack.c.h.b16 %v541
    %v1235 = vunpack.c.l.b16 %v542
    %v1236 = vunpack.c.h.b16 %v542
    %v1237 = vunpack.c.l.b16 %v543
    %v1238 = vunpack.c.h.b16 %v543
    %v1239 = vunpack.c.l.b16 %v544
    %v1240 = vunpack.c.h.b16 %v544
    %v1241 = vunpack.c.l.b16 %v545
    %v1242 = vunpack.c.h.b16 %v545
    %v1243 = vunpack.c.l.b16 %v546
    %v1244 = vunpack.c.h.b16 %v546
    %v1245 = vunpack.c.l.b16 %v547
    %v1246 = vunpack.c.h.b16 %v547
    %v1247 = vunpack.c.l.b16 %v548
    %v1248 = vunpack.c.h.b16 %v548
    %v1249 = vunpack.c.l.b16 %v549
    %v1250 = vunpack.c.h.b16 %v549
    %v1251 = vunpack.c.l.b16 %v550
    %v1252 = vunpack.c.h.b16 %v550
    %v1253 = vunpack.c.l.b16 %v551
    %v1254 = vunpack.c.h.b16 %v551
    %v1255 = vunpack.c.l.b16 %v552
    %v1256 = vunpack.c.h.b16 %v552
    %v1257 = vunpack.c.l.b16 %v553
    %v1258 = vunpack.c.h.b16 %v553
    %v1259 = vunpack.c.l.b16 %v554
    %v1260 = vunpack.c.h.b16 %v554
    %v1261 = vunpack.c.l.b16 %v555
    %v1262 = vunpack.c.h.b16 %v555
    %v1263 = vunpack.c.l.b16 %v556
    %v1264 = vunpack.c.h.b16 %v556
    %v1265 = vunpack.c.l.b16 %v557
    %v1266 = vunpack.c.h.b16 %v557
    %v1267 = vunpack.c.l.b16 %v558
    %v1268 = vunpack.c.h.b16 %v558
    %v1269 = vunpack.c.l.b16 %v559
    %v1270 = vunpack.c.h.b16 %v559
    %v1271 = vunpack.c.l.b16 %v560
    %v1272 = vunpack.c.h.b16 %v560
    %v1273 = vunpack.c.l.b16 %v561
    %v1274 = vunpack.c.h.b16 %v561
    %v1275 = vunpack.c.l.b16 %v562
    %v1276 = vunpack.c.h.b16 %v562
    %v1277 = vunpack.c.l.b16 %v563
    %v1278 = vunpack.c.h.b16 %v563
    %v1279 = vunpack.c.l.b16 %v564
    %v1280 = vunpack.c.h.b16 %v564
    %v1281 = vunpack.c.l.b16 %v565
    %v1282 = vunpack.c.h.b16 %v565
    %v1283 = vunpack.c.l.b16 %v566
    %v1284 = vunpack.c.h.b16 %v566
    %v1285 = vunpack.c.l.b16 %v567
    %v1286 = vunpack.c.h.b16 %v567
    %v1287 = vunpack.c.l.b16 %v568
    %v1288 = vunpack.c.h.b16 %v568
    %v1289 = vunpack.c.l.b16 %v569
    %v1290 = vunpack.c.h.b16 %v569
    %v1291 = vunpack.c.l.b16 %v570
    %v1292 = vunpack.c.h.b16 %v570
    %v1293 = vunpack.c.l.b16 %v571
    %v1294 = vunpack.c.h.b16 %v571
    %v1295 = vunpack.c.l.b16 %v572
    %v1296 = vunpack.c.h.b16 %v572
    %v1297 = vunpack.c.l.b16 %v573
    %v1298 = vunpack.c.h.b16 %v573
    %v1299 = vunpack.c.l.b16 %v574
    %v1300 = vunpack.c.h.b16 %v574
    %v1301 = vunpack.c.l.b16 %v575
    %v1302 = vunpack.c.h.b16 %v575
    %v1303 = vunpack.c.l.b16 %v576
    %v1304 = vunpack.c.h.b16 %v576
    %v1305 = vunpack.c.l.b16 %v577
    %v1306 = vunpack.c.h.b16 %v577
    %v1307 = vunpack.c.l.b16 %v578
    %v1308 = vunpack.c.h.b16 %v578
    %v1309 = vunpack.c.l.b16 %v579
    %v1310 = vunpack.c.h.b16 %v579
    %v1311 = vunpack.c.l.b16 %v580
    %v1312 = vunpack.c.h.b16 %v580
    %v1313 = vunpack.c.l.b16 %v581
    %v1314 = vunpack.c.h.b16 %v581
    %v1315 = vunpack.c.l.b16 %v582
    %v1316 = vunpack.c.h.b16 %v582
    %v1317 = vunpack.c.l.b16 %v583
    %v1318 = vunpack.c.h.b16 %v583
    %v1319 = vunpack.c.l.b16 %v584
    %v1320 = vunpack.c.h.b16 %v584
    %v1321 = vunpack.c.l.b16 %v585
    %v1322 = vunpack.c.h.b16 %v585
    %v1323 = vunpack.c.l.b16 %v586
    %v1324 = vunpack.c.h.b16 %v586
    %v1325 = vunpack.c.l.b16 %v587
    %v1326 = vunpack.c.h.b16 %v587
    %v1327 = vunpack.c.l.b16 %v588
    %v1328 = vunpack.c.h.b16 %v588
    %v1329 = vunpack.c.l.b16 %v589
    %v1330 = vunpack.c.h.b16 %v589
    %v1331 = vunpack.c.l.b16 %v590
    %v1332 = vunpack.c.h.b16 %v590
    %v1333 = vunpack.c.l.b16 %v591
    %v1334 = vunpack.c.h.b16 %v591
    %v1335 = vunpack.c.l.b16 %v592
    %v1336 = vunpack.c.h.b16 %v592
    %v1337 = vunpack.c.l.b16 %v593
    %v1338 = vunpack.c.h.b16 %v593
    %v1339 = vunpack.c.l.b16 %v594
    %v1340 = vunpack.c.h.b16 %v594
    %v1341 = vunpack.c.l.b16 %v595
    %v1342 = vunpack.c.h.b16 %v595
    %v1343 = vunpack.c.l.b16 %v596
    %v1344 = vunpack.c.h.b16 %v596
    %v1345 = vunpack.c.l.b16 %v597
    %v1346 = vunpack.c.h.b16 %v597
    %v1347 = vunpack.c.l.b16 %v598
    %v1348 = vunpack.c.h.b16 %v598
    %v1349 = vunpack.c.l.b16 %v599
    %v1350 = vunpack.c.h.b16 %v599
    %v1351 = vunpack.c.l.b16 %v600
    %v1352 = vunpack.c.h.b16 %v600
    %v1353 = vunpack.c.l.b16 %v601
    %v1354 = vunpack.c.h.b16 %v601
    %v1355 = vunpack.c.l.b16 %v602
    %v1356 = vunpack.c.h.b16 %v602
    %v1357 = vunpack.c.l.b16 %v603
    %v1358 = vunpack.c.h.b16 %v603
    %v1359 = vunpack.c.l.b16 %v604
    %v1360 = vunpack.c.h.b16 %v604
    %v1361 = vunpack.c.l.b16 %v605
    %v1362 = vunpack.c.h.b16 %v605
    %v1363 = vunpack.c.l.b16 %v606
    %v1364 = vunpack.c.h.b16 %v606
    %v1365 = vunpack.c.l.b16 %v607
    %v1366 = vunpack.c.h.b16 %v607
    %v1367 = vunpack.c.l.b16 %v608
    %v1368 = vunpack.c.h.b16 %v608
    %v1369 = vunpack.c.l.b16 %v609
    %v1370 = vunpack.c.h.b16 %v609
    %v1371 = vunpack.c.l.b16 %v610
    %v1372 = vunpack.c.h.b16 %v610
    %v1373 = vunpack.c.l.b16 %v611
    %v1374 = vunpack.c.h.b16 %v611
    %v1375 = vunpack.c.l.b16 %v612
    %v1376 = vunpack.c.h.b16 %v612
    %v1377 = vunpack.c.l.b16 %v613
    %v1378 = vunpack.c.h.b16 %v613
    %v1379 = vunpack.c.l.b16 %v614
    %v1380 = vunpack.c.h.b16 %v614
    %v1381 = vunpack.c.l.b16 %v615
    %v1382 = vunpack.c.h.b16 %v615
    %v1383 = vunpack.c.l.b16 %v616
    %v1384 = vunpack.c.h.b16 %v616
    %v1385 = vunpack.c.l.b16 %v617
    %v1386 = vunpack.c.h.b16 %v617
    %v1387 = vunpack.c.l.b16 %v618
    %v1388 = vunpack.c.h.b16 %v618
    %v1389 = vunpack.c.l.b16 %v619
    %v1390 = vunpack.c.h.b16 %v619
    %v1391 = vunpack.c.l.b16 %v620
    %v1392 = vunpack.c.h.b16 %v620
    %v1393 = vunpack.c.l.b16 %v621
    %v1394 = vunpack.c.h.b16 %v621
    %v1395 = vunpack.c.l.b16 %v622
    %v1396 = vunpack.c.h.b16 %v622
    %v1397 = vunpack.c.l.b16 %v623
    %v1398 = vunpack.c.h.b16 %v623
    %v1399 = vunpack.c.l.b16 %v624
    %v1400 = vunpack.c.h.b16 %v624
    %v1401 = vunpack.c.l.b16 %v625
    %v1402 = vunpack.c.h.b16 %v625
    %v1403 = vunpack.c.l.b16 %v626
    %v1404 = vunpack.c.h.b16 %v626
    %v1405 = vunpack.c.l.b16 %v627
    %v1406 = vunpack.c.h.b16 %v627
    %v1407 = vunpack.c.l.b16 %v628
    %v1408 = vunpack.c.h.b16 %v628
    %v1409 = vunpack.c.l.b16 %v629
    %v1410 = vunpack.c.h.b16 %v629
    %v1411 = vunpack.c.l.b16 %v630
    %v1412 = vunpack.c.h.b16 %v630
    %v1413 = vunpack.c.l.b16 %v631
    %v1414 = vunpack.c.h.b16 %v631
    %v1415 = vunpack.c.l.b16 %v632
    %v1416 = vunpack.c.h.b16 %v632
    %v1417 = vunpack.c.l.b16 %v633
    %v1418 = vunpack.c.h.b16 %v633
    %v1419 = vunpack.c.l.b16 %v634
    %v1420 = vunpack.c.h.b16 %v634
    %v1421 = vunpack.c.l.b16 %v635
    %v1422 = vunpack.c.h.b16 %v635
    %v1423 = vunpack.c.l.b16 %v636
    %v1424 = vunpack.c.h.b16 %v636
    %v1425 = vunpack.c.l.b16 %v637
    %v1426 = vunpack.c.h.b16 %v637
    %v1427 = vunpack.c.l.b16 %v638
    %v1428 = vunpack.c.h.b16 %v638
    %v1429 = vpack.c.b16 %v921, %v917
    %v1430 = vpack.c.b16 %v922, %v918
    %v1431 = vpack.c.b16 %v923, %v919
    %v1432 = vpack.c.b16 %v924, %v920
    %v1433 = vpack.c.b16 %v929, %v925
    %v1434 = vpack.c.b16 %v930, %v926
    %v1435 = vpack.c.b16 %v931, %v927
    %v1436 = vpack.c.b16 %v932, %v928
    %v1437 = vpack.c.b16 %v937, %v933
    %v1438 = vpack.c.b16 %v938, %v934
    %v1439 = vpack.c.b16 %v939, %v935
    %v1440 = vpack.c.b16 %v940, %v936
    %v1441 = vpack.c.b16 %v945, %v941
    %v1442 = vpack.c.b16 %v946, %v942
    %v1443 = vpack.c.b16 %v947, %v943
    %v1444 = vpack.c.b16 %v948, %v944
    %v1445 = vpack.c.b16 %v953, %v949
    %v1446 = vpack.c.b16 %v954, %v950
    %v1447 = vpack.c.b16 %v955, %v951
    %v1448 = vpack.c.b16 %v956, %v952
    %v1449 = vpack.c.b16 %v961, %v957
    %v1450 = vpack.c.b16 %v962, %v958
    %v1451 = vpack.c.b16 %v963, %v959
    %v1452 = vpack.c.b16 %v964, %v960
    %v1453 = vpack.c.b16 %v969, %v965
    %v1454 = vpack.c.b16 %v970, %v966
    %v1455 = vpack.c.b16 %v971, %v967
    %v1456 = vpack.c.b16 %v972, %v968
    %v1457 = vpack.c.b16 %v977, %v973
    %v1458 = vpack.c.b16 %v978, %v974
    %v1459 = vpack.c.b16 %v979, %v975
    %v1460 = vpack.c.b16 %v980, %v976
    %v1461 = vpack.c.b16 %v985, %v981
    %v1462 = vpack.c.b16 %v986, %v982
    %v1463 = vpack.c.b16 %v987, %v983
    %v1464 = vpack.c.b16 %v988, %v984
    %v1465 = vpack.c.b16 %v993, %v989
    %v1466 = vpack.c.b16 %v994, %v990
    %v1467 = vpack.c.b16 %v995, %v991
    %v1468 = vpack.c.b16 %v996, %v992
    %v1469 = vpack.c.b16 %v1001, %v997
    %v1470 = vpack.c.b16 %v1002, %v998
    %v1471 = vpack.c.b16 %v1003, %v999
    %v1472 = vpack.c.b16 %v1004, %v1000
    %v1473 = vpack.c.b16 %v1009, %v1005
    %v1474 = vpack.c.b16 %v1010, %v1006
    %v1475 = vpack.c.b16 %v1011, %v1007
    %v1476 = vpack.c.b16 %v1012, %v1008
    %v1477 = vpack.c.b16 %v1017, %v1013
    %v1478 = vpack.c.b16 %v1018, %v1014
    %v1479 = vpack.c.b16 %v1019, %v1015
    %v1480 = vpack.c.b16 %v1020, %v1016
    %v1481 = vpack.c.b16 %v1025, %v1021
    %v1482 = vpack.c.b16 %v1026, %v1022
    %v1483 = vpack.c.b16 %v1027, %v1023
    %v1484 = vpack.c.b16 %v1028, %v1024
    %v1485 = vpack.c.b16 %v1033, %v1029
    %v1486 = vpack.c.b16 %v1034, %v1030
    %v1487 = vpack.c.b16 %v1035, %v1031
    %v1488 = vpack.c.b16 %v1036, %v1032
    %v1489 = vpack.c.b16 %v1041, %v1037
    %v1490 = vpack.c.b16 %v1042, %v1038
    %v1491 = vpack.c.b16 %v1043, %v1039
    %v1492 = vpack.c.b16 %v1044, %v1040
    %v1493 = vpack.c.b16 %v1049, %v1045
    %v1494 = vpack.c.b16 %v1050, %v1046
    %v1495 = vpack.c.b16 %v1051, %v1047
    %v1496 = vpack.c.b16 %v1052, %v1048
    %v1497 = vpack.c.b16 %v1057, %v1053
    %v1498 = vpack.c.b16 %v1058, %v1054
    %v1499 = vpack.c.b16 %v1059, %v1055
    %v1500 = vpack.c.b16 %v1060, %v1056
    %v1501 = vpack.c.b16 %v1065, %v1061
    %v1502 = vpack.c.b16 %v1066, %v1062
    %v1503 = vpack.c.b16 %v1067, %v1063
    %v1504 = vpack.c.b16 %v1068, %v1064
    %v1505 = vpack.c.b16 %v1073, %v1069
    %v1506 = vpack.c.b16 %v1074, %v1070
    %v1507 = vpack.c.b16 %v1075, %v1071
    %v1508 = vpack.c.b16 %v1076, %v1072
    %v1509 = vpack.c.b16 %v1081, %v1077
    %v1510 = vpack.c.b16 %v1082, %v1078
    %v1511 = vpack.c.b16 %v1083, %v1079
    %v1512 = vpack.c.b16 %v1084, %v1080
    %v1513 = vpack.c.b16 %v1089, %v1085
    %v1514 = vpack.c.b16 %v1090, %v1086
    %v1515 = vpack.c.b16 %v1091, %v1087
    %v1516 = vpack.c.b16 %v1092, %v1088
    %v1517 = vpack.c.b16 %v1097, %v1093
    %v1518 = vpack.c.b16 %v1098, %v1094
    %v1519 = vpack.c.b16 %v1099, %v1095
    %v1520 = vpack.c.b16 %v1100, %v1096
    %v1521 = vpack.c.b16 %v1105, %v1101
    %v1522 = vpack.c.b16 %v1106, %v1102
    %v1523 = vpack.c.b16 %v1107, %v1103
    %v1524 = vpack.c.b16 %v1108, %v1104
    %v1525 = vpack.c.b16 %v1113, %v1109
    %v1526 = vpack.c.b16 %v1114, %v1110
    %v1527 = vpack.c.b16 %v1115, %v1111
    %v1528 = vpack.c.b16 %v1116, %v1112
    %v1529 = vpack.c.b16 %v1121, %v1117
    %v1530 = vpack.c.b16 %v1122, %v1118
    %v1531 = vpack.c.b16 %v1123, %v1119
    %v1532 = vpack.c.b16 %v1124, %v1120
    %v1533 = vpack.c.b16 %v1129, %v1125
    %v1534 = vpack.c.b16 %v1130, %v1126
    %v1535 = vpack.c.b16 %v1131, %v1127
    %v1536 = vpack.c.b16 %v1132, %v1128
    %v1537 = vpack.c.b16 %v1137, %v1133
    %v1538 = vpack.c.b16 %v1138, %v1134
    %v1539 = vpack.c.b16 %v1139, %v1135
    %v1540 = vpack.c.b16 %v1140, %v1136
    %v1541 = vpack.c.b16 %v1145, %v1141
    %v1542 = vpack.c.b16 %v1146, %v1142
    %v1543 = vpack.c.b16 %v1147, %v1143
    %v1544 = vpack.c.b16 %v1148, %v1144
    %v1545 = vpack.c.b16 %v1153, %v1149
    %v1546 = vpack.c.b16 %v1154, %v1150
    %v1547 = vpack.c.b16 %v1155, %v1151
    %v1548 = vpack.c.b16 %v1156, %v1152
    %v1549 = vpack.c.b16 %v1161, %v1157
    %v1550 = vpack.c.b16 %v1162, %v1158
    %v1551 = vpack.c.b16 %v1163, %v1159
    %v1552 = vpack.c.b16 %v1164, %v1160
    %v1553 = vpack.c.b16 %v1169, %v1165
    %v1554 = vpack.c.b16 %v1170, %v1166
    %v1555 = vpack.c.b16 %v1171, %v1167
    %v1556 = vpack.c.b16 %v1172, %v1168
    %v1557 = vpack.c.b16 %v1177, %v1173
    %v1558 = vpack.c.b16 %v1178, %v1174
    %v1559 = vpack.c.b16 %v1179, %v1175
    %v1560 = vpack.c.b16 %v1180, %v1176
    %v1561 = vpack.c.b16 %v1185, %v1181
    %v1562 = vpack.c.b16 %v1186, %v1182
    %v1563 = vpack.c.b16 %v1187, %v1183
    %v1564 = vpack.c.b16 %v1188, %v1184
    %v1565 = vpack.c.b16 %v1193, %v1189
    %v1566 = vpack.c.b16 %v1194, %v1190
    %v1567 = vpack.c.b16 %v1195, %v1191
    %v1568 = vpack.c.b16 %v1196, %v1192
    %v1569 = vpack.c.b16 %v1201, %v1197
    %v1570 = vpack.c.b16 %v1202, %v1198
    %v1571 = vpack.c.b16 %v1203, %v1199
    %v1572 = vpack.c.b16 %v1204, %v1200
    %v1573 = vpack.c.b16 %v1209, %v1205
    %v1574 = vpack.c.b16 %v1210, %v1206
    %v1575 = vpack.c.b16 %v1211, %v1207
    %v1576 = vpack.c.b16 %v1212, %v1208
    %v1577 = vpack.c.b16 %v1217, %v1213
    %v1578 = vpack.c.b16 %v1218, %v1214
    %v1579 = vpack.c.b16 %v1219, %v1215
    %v1580 = vpack.c.b16 %v1220, %v1216
    %v1581 = vpack.c.b16 %v1225, %v1221
    %v1582 = vpack.c.b16 %v1226, %v1222
    %v1583 = vpack.c.b16 %v1227, %v1223
    %v1584 = vpack.c.b16 %v1228, %v1224
    %v1585 = vpack.c.b16 %v1233, %v1229
    %v1586 = vpack.c.b16 %v1234, %v1230
    %v1587 = vpack.c.b16 %v1235, %v1231
    %v1588 = vpack.c.b16 %v1236, %v1232
    %v1589 = vpack.c.b16 %v1241, %v1237
    %v1590 = vpack.c.b16 %v1242, %v1238
    %v1591 = vpack.c.b16 %v1243, %v1239
    %v1592 = vpack.c.b16 %v1244, %v1240
    %v1593 = vpack.c.b16 %v1249, %v1245
    %v1594 = vpack.c.b16 %v1250, %v1246
    %v1595 = vpack.c.b16 %v1251, %v1247
    %v1596 = vpack.c.b16 %v1252, %v1248
    %v1597 = vpack.c.b16 %v1257, %v1253
    %v1598 = vpack.c.b16 %v1258, %v1254
    %v1599 = vpack.c.b16 %v1259, %v1255
    %v1600 = vpack.c.b16 %v1260, %v1256
    %v1601 = vpack.c.b16 %v1265, %v1261
    %v1602 = vpack.c.b16 %v1266, %v1262
    %v1603 = vpack.c.b16 %v1267, %v1263
    %v1604 = vpack.c.b16 %v1268, %v1264
    %v1605 = vpack.c.b16 %v1273, %v1269
    %v1606 = vpack.c.b16 %v1274, %v1270
    %v1607 = vpack.c.b16 %v1275, %v1271
    %v1608 = vpack.c.b16 %v1276, %v1272
    %v1609 = vpack.c.b16 %v1281, %v1277
    %v1610 = vpack.c.b16 %v1282, %v1278
    %v1611 = vpack.c.b16 %v1283, %v1279
    %v1612 = vpack.c.b16 %v1284, %v1280
    %v1613 = vpack.c.b16 %v1289, %v1285
    %v1614 = vpack.c.b16 %v1290, %v1286
    %v1615 = vpack.c.b16 %v1291, %v1287
    %v1616 = vpack.c.b16 %v1292, %v1288
    %v1617 = vpack.c.b16 %v1297, %v1293
    %v1618 = vpack.c.b16 %v1298, %v1294
    %v1619 = vpack.c.b16 %v1299, %v1295
    %v1620 = vpack.c.b16 %v1300, %v1296
    %v1621 = vpack.c.b16 %v1305, %v1301
    %v1622 = vpack.c.b16 %v1306, %v1302
    %v1623 = vpack.c.b16 %v1307, %v1303
    %v1624 = vpack.c.b16 %v1308, %v1304
    %v1625 = vpack.c.b16 %v1313, %v1309
    %v1626 = vpack.c.b16 %v1314, %v1310
    %v1627 = vpack.c.b16 %v1315, %v1311
    %v1628 = vpack.c.b16 %v1316, %v1312
    %v1629 = vpack.c.b16 %v1321, %v1317
    %v1630 = vpack.c.b16 %v1322, %v1318
    %v1631 = vpack.c.b16 %v1323, %v1319
    %v1632 = vpack.c.b16 %v1324, %v1320
    %v1633 = vpack.c.b16 %v1329, %v1325
    %v1634 = vpack.c.b16 %v1330, %v1326
    %v1635 = vpack.c.b16 %v1331, %v1327
    %v1636 = vpack.c.b16 %v1332, %v1328
    %v1637 = vpack.c.b16 %v1337, %v1333
    %v1638 = vpack.c.b16 %v1338, %v1334
    %v1639 = vpack.c.b16 %v1339, %v1335
    %v1640 = vpack.c.b16 %v1340, %v1336
    %v1641 = vpack.c.b16 %v1345, %v1341
    %v1642 = vpack.c.b16 %v1346, %v1342
    %v1643 = vpack.c.b16 %v1347, %v1343
    %v1644 = vpack.c.b16 %v1348, %v1344
    %v1645 = vpack.c.b16 %v1353, %v1349
    %v1646 = vpack.c.b16 %v1354, %v1350
    %v1647 = vpack.c.b16 %v1355, %v1351
    %v1648 = vpack.c.b16 %v1356, %v1352
    %v1649 = vpack.c.b16 %v1361, %v1357
    %v1650 = vpack.c.b16 %v1362, %v1358
    %v1651 = vpack.c.b16 %v1363, %v1359
    %v1652 = vpack.c.b16 %v1364, %v1360
    %v1653 = vpack.c.b16 %v1369, %v1365
    %v1654 = vpack.c.b16 %v1370, %v1366
    %v1655 = vpack.c.b16 %v1371, %v1367
    %v1656 = vpack.c.b16 %v1372, %v1368
    %v1657 = vpack.c.b16 %v1377, %v1373
    %v1658 = vpack.c.b16 %v1378, %v1374
    %v1659 = vpack.c.b16 %v1379, %v1375
    %v1660 = vpack.c.b16 %v1380, %v1376
    %v1661 = vpack.c.b16 %v1385, %v1381
    %v1662 = vpack.c.b16 %v1386, %v1382
    %v1663 = vpack.c.b16 %v1387, %v1383
    %v1664 = vpack.c.b16 %v1388, %v1384
    %v1665 = vpack.c.b16 %v1393, %v1389
    %v1666 = vpack.c.b16 %v1394, %v1390
    %v1667 = vpack.c.b16 %v1395, %v1391
    %v1668 = vpack.c.b16 %v1396, %v1392
    %v1669 = vpack.c.b16 %v1401, %v1397
    %v1670 = vpack.c.b16 %v1402, %v1398
    %v1671 = vpack.c.b16 %v1403, %v1399
    %v1672 = vpack.c.b16 %v1404, %v1400
    %v1673 = vpack.c.b16 %v1409, %v1405
    %v1674 = vpack.c.b16 %v1410, %v1406
    %v1675 = vpack.c.b16 %v1411, %v1407
    %v1676 = vpack.c.b16 %v1412, %v1408
    %v1677 = vpack.c.b16 %v1417, %v1413
    %v1678 = vpack.c.b16 %v1418, %v1414
    %v1679 = vpack.c.b16 %v1419, %v1415
    %v1680 = vpack.c.b16 %v1420, %v1416
    %v1681 = vpack.c.b16 %v1425, %v1421
    %v1682 = vpack.c.b16 %v1426, %v1422
    %v1683 = vpack.c.b16 %v1427, %v1423
    %v1684 = vpack.c.b16 %v1428, %v1424
    %1941 = vmatprep.subr.bf16.mxu0 %v1430
    %1942 = vmatpush1.bf16.msra.mxu0 %v1429
    %1943 = vmatprep.subr.bf16.mxu0 %v1434
    %1944 = vmatpush1.bf16.msra.mxu0 %v1433
    %1945 = vmatprep.subr.bf16.mxu0 %v1438
    %1946 = vmatpush1.bf16.msra.mxu0 %v1437
    %1947 = vmatprep.subr.bf16.mxu0 %v1442
    %1948 = vmatpush1.bf16.msra.mxu0 %v1441
    %1949 = vmatprep.subr.bf16.mxu0 %v1446
    %1950 = vmatpush1.bf16.msra.mxu0 %v1445
    %1951 = vmatprep.subr.bf16.mxu0 %v1450
    %1952 = vmatpush1.bf16.msra.mxu0 %v1449
    %1953 = vmatprep.subr.bf16.mxu0 %v1454
    %1954 = vmatpush1.bf16.msra.mxu0 %v1453
    %1955 = vmatprep.subr.bf16.mxu0 %v1458
    %1956 = vmatpush1.bf16.msra.mxu0 %v1457
    %1957 = vmatprep.subr.bf16.mxu0 %v1462
    %1958 = vmatpush1.bf16.msra.mxu0 %v1461
    %1959 = vmatprep.subr.bf16.mxu0 %v1466
    %1960 = vmatpush1.bf16.msra.mxu0 %v1465
    %1961 = vmatprep.subr.bf16.mxu0 %v1470
    %1962 = vmatpush1.bf16.msra.mxu0 %v1469
    %1963 = vmatprep.subr.bf16.mxu0 %v1474
    %1964 = vmatpush1.bf16.msra.mxu0 %v1473
    %1965 = vmatprep.subr.bf16.mxu0 %v1478
    %1966 = vmatpush1.bf16.msra.mxu0 %v1477
    %1967 = vmatprep.subr.bf16.mxu0 %v1482
    %1968 = vmatpush1.bf16.msra.mxu0 %v1481
    %1969 = vmatprep.subr.bf16.mxu0 %v1486
    %1970 = vmatpush1.bf16.msra.mxu0 %v1485
    %1971 = vmatprep.subr.bf16.mxu0 %v1490
    %1972 = vmatpush1.bf16.msra.mxu0 %v1489
    %1973 = vmatprep.mubr.bf16.mxu0 %v376
    %1974 = vmatmul.mubr.bf16.gmra.mrb[0].mxu0 %v375
    %v1975 = vpop.f32.mrb[0].mxu0
    %v1976 = vadd.f32 %v644, %v1975
    %v1977 = vpop.f32.mrb[0].mxu0
    %v1978 = vadd.f32 %v648, %v1977
    %v1979 = vpop.f32.mrb[0].mxu0
    %v1980 = vadd.f32 %v644, %v1979
    %v1981 = vpop.f32.mrb[0].mxu0
    %v1982 = vadd.f32 %v648, %v1981
    %1983 = vdwg.mxu0
    %1984 = vmatprep.subr.bf16.mxu0 %v1494
    %1985 = vmatpush1.bf16.msra.mxu0 %v1493
    %1986 = vmatprep.subr.bf16.mxu0 %v1498
    %1987 = vmatpush1.bf16.msra.mxu0 %v1497
    %1988 = vmatprep.subr.bf16.mxu0 %v1502
    %1989 = vmatpush1.bf16.msra.mxu0 %v1501
    %1990 = vmatprep.subr.bf16.mxu0 %v1506
    %1991 = vmatpush1.bf16.msra.mxu0 %v1505
    %1992 = vmatprep.subr.bf16.mxu0 %v1510
    %1993 = vmatpush1.bf16.msra.mxu0 %v1509
    %1994 = vmatprep.subr.bf16.mxu0 %v1514
    %1995 = vmatpush1.bf16.msra.mxu0 %v1513
    %1996 = vmatprep.subr.bf16.mxu0 %v1518
    %1997 = vmatpush1.bf16.msra.mxu0 %v1517
    %1998 = vmatprep.subr.bf16.mxu0 %v1522
    %1999 = vmatpush1.bf16.msra.mxu0 %v1521
    %2000 = vmatprep.subr.bf16.mxu0 %v1526
    %2001 = vmatpush1.bf16.msra.mxu0 %v1525
    %2002 = vmatprep.subr.bf16.mxu0 %v1530
    %2003 = vmatpush1.bf16.msra.mxu0 %v1529
    %2004 = vmatprep.subr.bf16.mxu0 %v1534
    %2005 = vmatpush1.bf16.msra.mxu0 %v1533
    %2006 = vmatprep.subr.bf16.mxu0 %v1538
    %2007 = vmatpush1.bf16.msra.mxu0 %v1537
    %2008 = vmatprep.subr.bf16.mxu0 %v1542
    %2009 = vmatpush1.bf16.msra.mxu0 %v1541
    %2010 = vmatprep.subr.bf16.mxu0 %v1546
    %2011 = vmatpush1.bf16.msra.mxu0 %v1545
    %2012 = vmatprep.subr.bf16.mxu0 %v1550
    %2013 = vmatpush1.bf16.msra.mxu0 %v1549
    %2014 = vmatprep.subr.bf16.mxu0 %v1554
    %2015 = vmatpush1.bf16.msra.mxu0 %v1553
    %2016 = vmatprep.mubr.bf16.mxu0 %v378
    %2017 = vmatmul.mubr.bf16.gmra.mrb[0].mxu0 %v377
    %v2018 = vpop.f32.mrb[0].mxu0
    %v2019 = vadd.f32 %v1976, %v2018
    %v2020 = vpop.f32.mrb[0].mxu0
    %v2021 = vadd.f32 %v1978, %v2020
    %v2022 = vpop.f32.mrb[0].mxu0
    %v2023 = vadd.f32 %v1980, %v2022
    %v2024 = vpop.f32.mrb[0].mxu0
    %v2025 = vadd.f32 %v1982, %v2024
    %2026 = vdwg.mxu0
    %2027 = vmatprep.subr.bf16.mxu0 %v1558
    %2028 = vmatpush1.bf16.msra.mxu0 %v1557
    %2029 = vmatprep.subr.bf16.mxu0 %v1562
    %2030 = vmatpush1.bf16.msra.mxu0 %v1561
    %2031 = vmatprep.subr.bf16.mxu0 %v1566
    %2032 = vmatpush1.bf16.msra.mxu0 %v1565
    %2033 = vmatprep.subr.bf16.mxu0 %v1570
    %2034 = vmatpush1.bf16.msra.mxu0 %v1569
    %2035 = vmatprep.subr.bf16.mxu0 %v1574
    %2036 = vmatpush1.bf16.msra.mxu0 %v1573
    %2037 = vmatprep.subr.bf16.mxu0 %v1578
    %2038 = vmatpush1.bf16.msra.mxu0 %v1577
    %2039 = vmatprep.subr.bf16.mxu0 %v1582
    %2040 = vmatpush1.bf16.msra.mxu0 %v1581
    %2041 = vmatprep.subr.bf16.mxu0 %v1586
    %2042 = vmatpush1.bf16.msra.mxu0 %v1585
    %2043 = vmatprep.subr.bf16.mxu0 %v1590
    %2044 = vmatpush1.bf16.msra.mxu0 %v1589
    %2045 = vmatprep.subr.bf16.mxu0 %v1594
    %2046 = vmatpush1.bf16.msra.mxu0 %v1593
    %2047 = vmatprep.subr.bf16.mxu0 %v1598
    %2048 = vmatpush1.bf16.msra.mxu0 %v1597
    %2049 = vmatprep.subr.bf16.mxu0 %v1602
    %2050 = vmatpush1.bf16.msra.mxu0 %v1601
    %2051 = vmatprep.subr.bf16.mxu0 %v1606
    %2052 = vmatpush1.bf16.msra.mxu0 %v1605
    %2053 = vmatprep.subr.bf16.mxu0 %v1610
    %2054 = vmatpush1.bf16.msra.mxu0 %v1609
    %2055 = vmatprep.subr.bf16.mxu0 %v1614
    %2056 = vmatpush1.bf16.msra.mxu0 %v1613
    %2057 = vmatprep.subr.bf16.mxu0 %v1618
    %2058 = vmatpush1.bf16.msra.mxu0 %v1617
    %2059 = vmatprep.mubr.bf16.mxu0 %v380
    %2060 = vmatmul.mubr.bf16.gmra.mrb[0].mxu0 %v379
    %v2061 = vpop.f32.mrb[0].mxu0
    %v2062 = vadd.f32 %v2019, %v2061
    %v2063 = vpop.f32.mrb[0].mxu0
    %v2064 = vadd.f32 %v2021, %v2063
    %v2065 = vpop.f32.mrb[0].mxu0
    %v2066 = vadd.f32 %v2023, %v2065
    %v2067 = vpop.f32.mrb[0].mxu0
    %v2068 = vadd.f32 %v2025, %v2067
    %2069 = vdwg.mxu0
    %2070 = vmatprep.subr.bf16.mxu0 %v1622
    %2071 = vmatpush1.bf16.msra.mxu0 %v1621
    %2072 = vmatprep.subr.bf16.mxu0 %v1626
    %2073 = vmatpush1.bf16.msra.mxu0 %v1625
    %2074 = vmatprep.subr.bf16.mxu0 %v1630
    %2075 = vmatpush1.bf16.msra.mxu0 %v1629
    %2076 = vmatprep.subr.bf16.mxu0 %v1634
    %2077 = vmatpush1.bf16.msra.mxu0 %v1633
    %2078 = vmatprep.subr.bf16.mxu0 %v1638
    %2079 = vmatpush1.bf16.msra.mxu0 %v1637
    %2080 = vmatprep.subr.bf16.mxu0 %v1642
    %2081 = vmatpush1.bf16.msra.mxu0 %v1641
    %2082 = vmatprep.subr.bf16.mxu0 %v1646
    %2083 = vmatpush1.bf16.msra.mxu0 %v1645
    %2084 = vmatprep.subr.bf16.mxu0 %v1650
    %2085 = vmatpush1.bf16.msra.mxu0 %v1649
    %2086 = vmatprep.subr.bf16.mxu0 %v1654
    %2087 = vmatpush1.bf16.msra.mxu0 %v1653
    %2088 = vmatprep.subr.bf16.mxu0 %v1658
    %2089 = vmatpush1.bf16.msra.mxu0 %v1657
    %2090 = vmatprep.subr.bf16.mxu0 %v1662
    %2091 = vmatpush1.bf16.msra.mxu0 %v1661
    %2092 = vmatprep.subr.bf16.mxu0 %v1666
    %2093 = vmatpush1.bf16.msra.mxu0 %v1665
    %2094 = vmatprep.subr.bf16.mxu0 %v1670
    %2095 = vmatpush1.bf16.msra.mxu0 %v1669
    %2096 = vmatprep.subr.bf16.mxu0 %v1674
    %2097 = vmatpush1.bf16.msra.mxu0 %v1673
    %2098 = vmatprep.subr.bf16.mxu0 %v1678
    %2099 = vmatpush1.bf16.msra.mxu0 %v1677
    %2100 = vmatprep.subr.bf16.mxu0 %v1682
    %2101 = vmatpush1.bf16.msra.mxu0 %v1681
    %2102 = vmatprep.mubr.bf16.mxu0 %v382
    %2103 = vmatmul.mubr.bf16.gmra.mrb[0].mxu0 %v381
    %v2104 = vpop.f32.mrb[0].mxu0
    %v2105 = vadd.f32 %v2062, %v2104
    %v2106 = vpop.f32.mrb[0].mxu0
    %v2107 = vadd.f32 %v2064, %v2106
    %v2108 = vpop.f32.mrb[0].mxu0
    %v2109 = vadd.f32 %v2066, %v2108
    %v2110 = vpop.f32.mrb[0].mxu0
    %v2111 = vadd.f32 %v2068, %v2110
    %2112 = vdwg.mxu0
    %2113 = vmatprep.subr.bf16.mxu0 %v1432
    %2114 = vmatpush1.bf16.msra.mxu0 %v1431
    %2115 = vmatprep.subr.bf16.mxu0 %v1436
    %2116 = vmatpush1.bf16.msra.mxu0 %v1435
    %2117 = vmatprep.subr.bf16.mxu0 %v1440
    %2118 = vmatpush1.bf16.msra.mxu0 %v1439
    %2119 = vmatprep.subr.bf16.mxu0 %v1444
    %2120 = vmatpush1.bf16.msra.mxu0 %v1443
    %2121 = vmatprep.subr.bf16.mxu0 %v1448
    %2122 = vmatpush1.bf16.msra.mxu0 %v1447
    %2123 = vmatprep.subr.bf16.mxu0 %v1452
    %2124 = vmatpush1.bf16.msra.mxu0 %v1451
    %2125 = vmatprep.subr.bf16.mxu0 %v1456
    %2126 = vmatpush1.bf16.msra.mxu0 %v1455
    %2127 = vmatprep.subr.bf16.mxu0 %v1460
    %2128 = vmatpush1.bf16.msra.mxu0 %v1459
    %2129 = vmatprep.subr.bf16.mxu0 %v1464
    %2130 = vmatpush1.bf16.msra.mxu0 %v1463
    %2131 = vmatprep.subr.bf16.mxu0 %v1468
    %2132 = vmatpush1.bf16.msra.mxu0 %v1467
    %2133 = vmatprep.subr.bf16.mxu0 %v1472
    %2134 = vmatpush1.bf16.msra.mxu0 %v1471
    %2135 = vmatprep.subr.bf16.mxu0 %v1476
    %2136 = vmatpush1.bf16.msra.mxu0 %v1475
    %2137 = vmatprep.subr.bf16.mxu0 %v1480
    %2138 = vmatpush1.bf16.msra.mxu0 %v1479
    %2139 = vmatprep.subr.bf16.mxu0 %v1484
    %2140 = vmatpush1.bf16.msra.mxu0 %v1483
    %2141 = vmatprep.subr.bf16.mxu0 %v1488
    %2142 = vmatpush1.bf16.msra.mxu0 %v1487
    %2143 = vmatprep.subr.bf16.mxu0 %v1492
    %2144 = vmatpush1.bf16.msra.mxu0 %v1491
    %2145 = vmatprep.mubr.bf16.mxu0 %v376
    %2146 = vmatmul.mubr.bf16.gmra.mrb[0].mxu0 %v375
    %v2147 = vpop.f32.mrb[0].mxu0
    %v2148 = vadd.f32 %v652, %v2147
    %v2149 = vpop.f32.mrb[0].mxu0
    %v2150 = vadd.f32 %v656, %v2149
    %v2151 = vpop.f32.mrb[0].mxu0
    %v2152 = vadd.f32 %v652, %v2151
    %v2153 = vpop.f32.mrb[0].mxu0
    %v2154 = vadd.f32 %v656, %v2153
    %2155 = vdwg.mxu0
    %2156 = vmatprep.subr.bf16.mxu0 %v1496
    %2157 = vmatpush1.bf16.msra.mxu0 %v1495
    %2158 = vmatprep.subr.bf16.mxu0 %v1500
    %2159 = vmatpush1.bf16.msra.mxu0 %v1499
    %2160 = vmatprep.subr.bf16.mxu0 %v1504
    %2161 = vmatpush1.bf16.msra.mxu0 %v1503
    %2162 = vmatprep.subr.bf16.mxu0 %v1508
    %2163 = vmatpush1.bf16.msra.mxu0 %v1507
    %2164 = vmatprep.subr.bf16.mxu0 %v1512
    %2165 = vmatpush1.bf16.msra.mxu0 %v1511
    %2166 = vmatprep.subr.bf16.mxu0 %v1516
    %2167 = vmatpush1.bf16.msra.mxu0 %v1515
    %2168 = vmatprep.subr.bf16.mxu0 %v1520
    %2169 = vmatpush1.bf16.msra.mxu0 %v1519
    %2170 = vmatprep.subr.bf16.mxu0 %v1524
    %2171 = vmatpush1.bf16.msra.mxu0 %v1523
    %2172 = vmatprep.subr.bf16.mxu0 %v1528
    %2173 = vmatpush1.bf16.msra.mxu0 %v1527
    %2174 = vmatprep.subr.bf16.mxu0 %v1532
    %2175 = vmatpush1.bf16.msra.mxu0 %v1531
    %2176 = vmatprep.subr.bf16.mxu0 %v1536
    %2177 = vmatpush1.bf16.msra.mxu0 %v1535
    %2178 = vmatprep.subr.bf16.mxu0 %v1540
    %2179 = vmatpush1.bf16.msra.mxu0 %v1539
    %2180 = vmatprep.subr.bf16.mxu0 %v1544
    %2181 = vmatpush1.bf16.msra.mxu0 %v1543
    %2182 = vmatprep.subr.bf16.mxu0 %v1548
    %2183 = vmatpush1.bf16.msra.mxu0 %v1547
    %2184 = vmatprep.subr.bf16.mxu0 %v1552
    %2185 = vmatpush1.bf16.msra.mxu0 %v1551
    %2186 = vmatprep.subr.bf16.mxu0 %v1556
    %2187 = vmatpush1.bf16.msra.mxu0 %v1555
    %2188 = vmatprep.mubr.bf16.mxu0 %v378
    %2189 = vmatmul.mubr.bf16.gmra.mrb[0].mxu0 %v377
    %v2190 = vpop.f32.mrb[0].mxu0
    %v2191 = vadd.f32 %v2148, %v2190
    %v2192 = vpop.f32.mrb[0].mxu0
    %v2193 = vadd.f32 %v2150, %v2192
    %v2194 = vpop.f32.mrb[0].mxu0
    %v2195 = vadd.f32 %v2152, %v2194
    %v2196 = vpop.f32.mrb[0].mxu0
    %v2197 = vadd.f32 %v2154, %v2196
    %2198 = vdwg.mxu0
    %2199 = vmatprep.subr.bf16.mxu0 %v1560
    %2200 = vmatpush1.bf16.msra.mxu0 %v1559
    %2201 = vmatprep.subr.bf16.mxu0 %v1564
    %2202 = vmatpush1.bf16.msra.mxu0 %v1563
    %2203 = vmatprep.subr.bf16.mxu0 %v1568
    %2204 = vmatpush1.bf16.msra.mxu0 %v1567
    %2205 = vmatprep.subr.bf16.mxu0 %v1572
    %2206 = vmatpush1.bf16.msra.mxu0 %v1571
    %2207 = vmatprep.subr.bf16.mxu0 %v1576
    %2208 = vmatpush1.bf16.msra.mxu0 %v1575
    %2209 = vmatprep.subr.bf16.mxu0 %v1580
    %2210 = vmatpush1.bf16.msra.mxu0 %v1579
    %2211 = vmatprep.subr.bf16.mxu0 %v1584
    %2212 = vmatpush1.bf16.msra.mxu0 %v1583
    %2213 = vmatprep.subr.bf16.mxu0 %v1588
    %2214 = vmatpush1.bf16.msra.mxu0 %v1587
    %2215 = vmatprep.subr.bf16.mxu0 %v1592
    %2216 = vmatpush1.bf16.msra.mxu0 %v1591
    %2217 = vmatprep.subr.bf16.mxu0 %v1596
    %2218 = vmatpush1.bf16.msra.mxu0 %v1595
    %2219 = vmatprep.subr.bf16.mxu0 %v1600
    %2220 = vmatpush1.bf16.msra.mxu0 %v1599
    %2221 = vmatprep.subr.bf16.mxu0 %v1604
    %2222 = vmatpush1.bf16.msra.mxu0 %v1603
    %2223 = vmatprep.subr.bf16.mxu0 %v1608
    %2224 = vmatpush1.bf16.msra.mxu0 %v1607
    %2225 = vmatprep.subr.bf16.mxu0 %v1612
    %2226 = vmatpush1.bf16.msra.mxu0 %v1611
    %2227 = vmatprep.subr.bf16.mxu0 %v1616
    %2228 = vmatpush1.bf16.msra.mxu0 %v1615
    %2229 = vmatprep.subr.bf16.mxu0 %v1620
    %2230 = vmatpush1.bf16.msra.mxu0 %v1619
    %2231 = vmatprep.mubr.bf16.mxu0 %v380
    %2232 = vmatmul.mubr.bf16.gmra.mrb[0].mxu0 %v379
    %v2233 = vpop.f32.mrb[0].mxu0
    %v2234 = vadd.f32 %v2191, %v2233
    %v2235 = vpop.f32.mrb[0].mxu0
    %v2236 = vadd.f32 %v2193, %v2235
    %v2237 = vpop.f32.mrb[0].mxu0
    %v2238 = vadd.f32 %v2195, %v2237
    %v2239 = vpop.f32.mrb[0].mxu0
    %v2240 = vadd.f32 %v2197, %v2239
    %2241 = vdwg.mxu0
    %2242 = vmatprep.subr.bf16.mxu0 %v1624
    %2243 = vmatpush1.bf16.msra.mxu0 %v1623
    %2244 = vmatprep.subr.bf16.mxu0 %v1628
    %2245 = vmatpush1.bf16.msra.mxu0 %v1627
    %2246 = vmatprep.subr.bf16.mxu0 %v1632
    %2247 = vmatpush1.bf16.msra.mxu0 %v1631
    %2248 = vmatprep.subr.bf16.mxu0 %v1636
    %2249 = vmatpush1.bf16.msra.mxu0 %v1635
    %2250 = vmatprep.subr.bf16.mxu0 %v1640
    %2251 = vmatpush1.bf16.msra.mxu0 %v1639
    %2252 = vmatprep.subr.bf16.mxu0 %v1644
    %2253 = vmatpush1.bf16.msra.mxu0 %v1643
    %2254 = vmatprep.subr.bf16.mxu0 %v1648
    %2255 = vmatpush1.bf16.msra.mxu0 %v1647
    %2256 = vmatprep.subr.bf16.mxu0 %v1652
    %2257 = vmatpush1.bf16.msra.mxu0 %v1651
    %2258 = vmatprep.subr.bf16.mxu0 %v1656
    %2259 = vmatpush1.bf16.msra.mxu0 %v1655
    %2260 = vmatprep.subr.bf16.mxu0 %v1660
    %2261 = vmatpush1.bf16.msra.mxu0 %v1659
    %2262 = vmatprep.subr.bf16.mxu0 %v1664
    %2263 = vmatpush1.bf16.msra.mxu0 %v1663
    %2264 = vmatprep.subr.bf16.mxu0 %v1668
    %2265 = vmatpush1.bf16.msra.mxu0 %v1667
    %2266 = vmatprep.subr.bf16.mxu0 %v1672
    %2267 = vmatpush1.bf16.msra.mxu0 %v1671
    %2268 = vmatprep.subr.bf16.mxu0 %v1676
    %2269 = vmatpush1.bf16.msra.mxu0 %v1675
    %2270 = vmatprep.subr.bf16.mxu0 %v1680
    %2271 = vmatpush1.bf16.msra.mxu0 %v1679
    %2272 = vmatprep.subr.bf16.mxu0 %v1684
    %2273 = vmatpush1.bf16.msra.mxu0 %v1683
    %2274 = vmatprep.mubr.bf16.mxu0 %v382
    %2275 = vmatmul.mubr.bf16.gmra.mrb[0].mxu0 %v381
    %v2276 = vpop.f32.mrb[0].mxu0
    %v2277 = vadd.f32 %v2234, %v2276
    %v2278 = vpop.f32.mrb[0].mxu0
    %v2279 = vadd.f32 %v2236, %v2278
    %v2280 = vpop.f32.mrb[0].mxu0
    %v2281 = vadd.f32 %v2238, %v2280
    %v2282 = vpop.f32.mrb[0].mxu0
    %v2283 = vadd.f32 %v2240, %v2282
    %2284 = vdwg.mxu0
    %v2285 = vmax.f32 %v2105, 0.0
    %v2286 = vmax.f32 %v2107, 0.0
    %v2287 = vmax.f32 %v2277, 0.0
    %v2288 = vmax.f32 %v2279, 0.0
    %v2289 = vmax.f32 %v2109, 0.0
    %v2290 = vmax.f32 %v2111, 0.0
    %v2291 = vmax.f32 %v2281, 0.0
    %v2292 = vmax.f32 %v2283, 0.0
    %v2293 = vpack.c.bf16 %v2289, %v2285
    %v2294 = vpack.c.bf16 %v2290, %v2286
    %v2295 = vpack.c.bf16 %v2291, %v2287
    %v2296 = vpack.c.bf16 %v2292, %v2288
    %v2297 = vld [vmem:[%s5] sm:$0xff]
    %v2298 = vld [vmem:[%s5 + $0x8] sm:$0xff]
    %v2299 = vld [vmem:[%s5 + $0x10] sm:$0xff]
    %v2300 = vld [vmem:[%s5 + $0x18] sm:$0xff]
    %v2301 = vld [vmem:[%s5 + $0x20] sm:$0xff]
    %v2302 = vld [vmem:[%s5 + $0x28] sm:$0xff]
    %v2303 = vld [vmem:[%s5 + $0x30] sm:$0xff]
    %v2304 = vld [vmem:[%s5 + $0x38] sm:$0xff]
    %v2305 = vld [vmem:[%s5 + $0x40] sm:$0xff]
    %v2306 = vld [vmem:[%s5 + $0x48] sm:$0xff]
    %v2307 = vld [vmem:[%s5 + $0x50] sm:$0xff]
    %v2308 = vld [vmem:[%s5 + $0x58] sm:$0xff]
    %v2309 = vld [vmem:[%s5 + $0x60] sm:$0xff]
    %v2310 = vld [vmem:[%s5 + $0x68] sm:$0xff]
    %v2311 = vld [vmem:[%s5 + $0x70] sm:$0xff]
    %v2312 = vld [vmem:[%s5 + $0x78] sm:$0xff]
    %v2313 = vld [vmem:[%s5 + $0x80] sm:$0xff]
    %v2314 = vld [vmem:[%s5 + $0x88] sm:$0xff]
    %v2315 = vld [vmem:[%s5 + $0x90] sm:$0xff]
    %v2316 = vld [vmem:[%s5 + $0x98] sm:$0xff]
    %v2317 = vld [vmem:[%s5 + $0xa0] sm:$0xff]
    %v2318 = vld [vmem:[%s5 + $0xa8] sm:$0xff]
    %v2319 = vld [vmem:[%s5 + $0xb0] sm:$0xff]
    %v2320 = vld [vmem:[%s5 + $0xb8] sm:$0xff]
    %v2321 = vld [vmem:[%s5 + $0xc0] sm:$0xff]
    %v2322 = vld [vmem:[%s5 + $0xc8] sm:$0xff]
    %v2323 = vld [vmem:[%s5 + $0xd0] sm:$0xff]
    %v2324 = vld [vmem:[%s5 + $0xd8] sm:$0xff]
    %v2325 = vld [vmem:[%s5 + $0xe0] sm:$0xff]
    %v2326 = vld [vmem:[%s5 + $0xe8] sm:$0xff]
    %v2327 = vld [vmem:[%s5 + $0xf0] sm:$0xff]
    %v2328 = vld [vmem:[%s5 + $0xf8] sm:$0xff]
    %v2329 = vld [vmem:[%s5 + $0x100] sm:$0xff]
    %v2330 = vld [vmem:[%s5 + $0x108] sm:$0xff]
    %v2331 = vld [vmem:[%s5 + $0x110] sm:$0xff]
    %v2332 = vld [vmem:[%s5 + $0x118] sm:$0xff]
    %v2333 = vld [vmem:[%s5 + $0x120] sm:$0xff]
    %v2334 = vld [vmem:[%s5 + $0x128] sm:$0xff]
    %v2335 = vld [vmem:[%s5 + $0x130] sm:$0xff]
    %v2336 = vld [vmem:[%s5 + $0x138] sm:$0xff]
    %v2337 = vld [vmem:[%s5 + $0x140] sm:$0xff]
    %v2338 = vld [vmem:[%s5 + $0x148] sm:$0xff]
    %v2339 = vld [vmem:[%s5 + $0x150] sm:$0xff]
    %v2340 = vld [vmem:[%s5 + $0x158] sm:$0xff]
    %v2341 = vld [vmem:[%s5 + $0x160] sm:$0xff]
    %v2342 = vld [vmem:[%s5 + $0x168] sm:$0xff]
    %v2343 = vld [vmem:[%s5 + $0x170] sm:$0xff]
    %v2344 = vld [vmem:[%s5 + $0x178] sm:$0xff]
    %v2345 = vld [vmem:[%s5 + $0x180] sm:$0xff]
    %v2346 = vld [vmem:[%s5 + $0x188] sm:$0xff]
    %v2347 = vld [vmem:[%s5 + $0x190] sm:$0xff]
    %v2348 = vld [vmem:[%s5 + $0x198] sm:$0xff]
    %v2349 = vld [vmem:[%s5 + $0x1a0] sm:$0xff]
    %v2350 = vld [vmem:[%s5 + $0x1a8] sm:$0xff]
    %v2351 = vld [vmem:[%s5 + $0x1b0] sm:$0xff]
    %v2352 = vld [vmem:[%s5 + $0x1b8] sm:$0xff]
    %v2353 = vld [vmem:[%s5 + $0x1c0] sm:$0xff]
    %v2354 = vld [vmem:[%s5 + $0x1c8] sm:$0xff]
    %v2355 = vld [vmem:[%s5 + $0x1d0] sm:$0xff]
    %v2356 = vld [vmem:[%s5 + $0x1d8] sm:$0xff]
    %v2357 = vld [vmem:[%s5 + $0x1e0] sm:$0xff]
    %v2358 = vld [vmem:[%s5 + $0x1e8] sm:$0xff]
    %v2359 = vld [vmem:[%s5 + $0x1f0] sm:$0xff]
    %v2360 = vld [vmem:[%s5 + $0x1f8] sm:$0xff]
    %v2361 = vld [vmem:[%s6] sm:$0x3]
    %v2363 = vlaneseq
    %v2364 = vshrl.u32 %v2363, 7
    %v2365 = vsub.s32 0, %v2364
    %v2366 = vrot.slane %v2361, %v2365
    %v2367 = vlaneseq
    %v2368 = vshrl.u32 %v2367, 7
    %v2369 = vsub.s32 1, %v2368
    %v2370 = vrot.slane %v2361, %v2369
    %v2437 = vunpack.c.l.b16 %v2297
    %v2438 = vunpack.c.h.b16 %v2297
    %v2439 = vunpack.c.l.b16 %v2298
    %v2440 = vunpack.c.h.b16 %v2298
    %v2441 = vunpack.c.l.b16 %v2299
    %v2442 = vunpack.c.h.b16 %v2299
    %v2443 = vunpack.c.l.b16 %v2300
    %v2444 = vunpack.c.h.b16 %v2300
    %v2445 = vunpack.c.l.b16 %v2301
    %v2446 = vunpack.c.h.b16 %v2301
    %v2447 = vunpack.c.l.b16 %v2302
    %v2448 = vunpack.c.h.b16 %v2302
    %v2449 = vunpack.c.l.b16 %v2303
    %v2450 = vunpack.c.h.b16 %v2303
    %v2451 = vunpack.c.l.b16 %v2304
    %v2452 = vunpack.c.h.b16 %v2304
    %v2453 = vunpack.c.l.b16 %v2305
    %v2454 = vunpack.c.h.b16 %v2305
    %v2455 = vunpack.c.l.b16 %v2306
    %v2456 = vunpack.c.h.b16 %v2306
    %v2457 = vunpack.c.l.b16 %v2307
    %v2458 = vunpack.c.h.b16 %v2307
    %v2459 = vunpack.c.l.b16 %v2308
    %v2460 = vunpack.c.h.b16 %v2308
    %v2461 = vunpack.c.l.b16 %v2309
    %v2462 = vunpack.c.h.b16 %v2309
    %v2463 = vunpack.c.l.b16 %v2310
    %v2464 = vunpack.c.h.b16 %v2310
    %v2465 = vunpack.c.l.b16 %v2311
    %v2466 = vunpack.c.h.b16 %v2311
    %v2467 = vunpack.c.l.b16 %v2312
    %v2468 = vunpack.c.h.b16 %v2312
    %v2469 = vunpack.c.l.b16 %v2313
    %v2470 = vunpack.c.h.b16 %v2313
    %v2471 = vunpack.c.l.b16 %v2314
    %v2472 = vunpack.c.h.b16 %v2314
    %v2473 = vunpack.c.l.b16 %v2315
    %v2474 = vunpack.c.h.b16 %v2315
    %v2475 = vunpack.c.l.b16 %v2316
    %v2476 = vunpack.c.h.b16 %v2316
    %v2477 = vunpack.c.l.b16 %v2317
    %v2478 = vunpack.c.h.b16 %v2317
    %v2479 = vunpack.c.l.b16 %v2318
    %v2480 = vunpack.c.h.b16 %v2318
    %v2481 = vunpack.c.l.b16 %v2319
    %v2482 = vunpack.c.h.b16 %v2319
    %v2483 = vunpack.c.l.b16 %v2320
    %v2484 = vunpack.c.h.b16 %v2320
    %v2485 = vunpack.c.l.b16 %v2321
    %v2486 = vunpack.c.h.b16 %v2321
    %v2487 = vunpack.c.l.b16 %v2322
    %v2488 = vunpack.c.h.b16 %v2322
    %v2489 = vunpack.c.l.b16 %v2323
    %v2490 = vunpack.c.h.b16 %v2323
    %v2491 = vunpack.c.l.b16 %v2324
    %v2492 = vunpack.c.h.b16 %v2324
    %v2493 = vunpack.c.l.b16 %v2325
    %v2494 = vunpack.c.h.b16 %v2325
    %v2495 = vunpack.c.l.b16 %v2326
    %v2496 = vunpack.c.h.b16 %v2326
    %v2497 = vunpack.c.l.b16 %v2327
    %v2498 = vunpack.c.h.b16 %v2327
    %v2499 = vunpack.c.l.b16 %v2328
    %v2500 = vunpack.c.h.b16 %v2328
    %v2501 = vunpack.c.l.b16 %v2329
    %v2502 = vunpack.c.h.b16 %v2329
    %v2503 = vunpack.c.l.b16 %v2330
    %v2504 = vunpack.c.h.b16 %v2330
    %v2505 = vunpack.c.l.b16 %v2331
    %v2506 = vunpack.c.h.b16 %v2331
    %v2507 = vunpack.c.l.b16 %v2332
    %v2508 = vunpack.c.h.b16 %v2332
    %v2509 = vunpack.c.l.b16 %v2333
    %v2510 = vunpack.c.h.b16 %v2333
    %v2511 = vunpack.c.l.b16 %v2334
    %v2512 = vunpack.c.h.b16 %v2334
    %v2513 = vunpack.c.l.b16 %v2335
    %v2514 = vunpack.c.h.b16 %v2335
    %v2515 = vunpack.c.l.b16 %v2336
    %v2516 = vunpack.c.h.b16 %v2336
    %v2517 = vunpack.c.l.b16 %v2337
    %v2518 = vunpack.c.h.b16 %v2337
    %v2519 = vunpack.c.l.b16 %v2338
    %v2520 = vunpack.c.h.b16 %v2338
    %v2521 = vunpack.c.l.b16 %v2339
    %v2522 = vunpack.c.h.b16 %v2339
    %v2523 = vunpack.c.l.b16 %v2340
    %v2524 = vunpack.c.h.b16 %v2340
    %v2525 = vunpack.c.l.b16 %v2341
    %v2526 = vunpack.c.h.b16 %v2341
    %v2527 = vunpack.c.l.b16 %v2342
    %v2528 = vunpack.c.h.b16 %v2342
    %v2529 = vunpack.c.l.b16 %v2343
    %v2530 = vunpack.c.h.b16 %v2343
    %v2531 = vunpack.c.l.b16 %v2344
    %v2532 = vunpack.c.h.b16 %v2344
    %v2533 = vunpack.c.l.b16 %v2345
    %v2534 = vunpack.c.h.b16 %v2345
    %v2535 = vunpack.c.l.b16 %v2346
    %v2536 = vunpack.c.h.b16 %v2346
    %v2537 = vunpack.c.l.b16 %v2347
    %v2538 = vunpack.c.h.b16 %v2347
    %v2539 = vunpack.c.l.b16 %v2348
    %v2540 = vunpack.c.h.b16 %v2348
    %v2541 = vunpack.c.l.b16 %v2349
    %v2542 = vunpack.c.h.b16 %v2349
    %v2543 = vunpack.c.l.b16 %v2350
    %v2544 = vunpack.c.h.b16 %v2350
    %v2545 = vunpack.c.l.b16 %v2351
    %v2546 = vunpack.c.h.b16 %v2351
    %v2547 = vunpack.c.l.b16 %v2352
    %v2548 = vunpack.c.h.b16 %v2352
    %v2549 = vunpack.c.l.b16 %v2353
    %v2550 = vunpack.c.h.b16 %v2353
    %v2551 = vunpack.c.l.b16 %v2354
    %v2552 = vunpack.c.h.b16 %v2354
    %v2553 = vunpack.c.l.b16 %v2355
    %v2554 = vunpack.c.h.b16 %v2355
    %v2555 = vunpack.c.l.b16 %v2356
    %v2556 = vunpack.c.h.b16 %v2356
    %v2557 = vunpack.c.l.b16 %v2357
    %v2558 = vunpack.c.h.b16 %v2357
    %v2559 = vunpack.c.l.b16 %v2358
    %v2560 = vunpack.c.h.b16 %v2358
    %v2561 = vunpack.c.l.b16 %v2359
    %v2562 = vunpack.c.h.b16 %v2359
    %v2563 = vunpack.c.l.b16 %v2360
    %v2564 = vunpack.c.h.b16 %v2360
    %v2565 = vpack.c.b16 %v2439, %v2437
    %v2566 = vpack.c.b16 %v2440, %v2438
    %v2567 = vpack.c.b16 %v2443, %v2441
    %v2568 = vpack.c.b16 %v2444, %v2442
    %v2569 = vpack.c.b16 %v2447, %v2445
    %v2570 = vpack.c.b16 %v2448, %v2446
    %v2571 = vpack.c.b16 %v2451, %v2449
    %v2572 = vpack.c.b16 %v2452, %v2450
    %v2573 = vpack.c.b16 %v2455, %v2453
    %v2574 = vpack.c.b16 %v2456, %v2454
    %v2575 = vpack.c.b16 %v2459, %v2457
    %v2576 = vpack.c.b16 %v2460, %v2458
    %v2577 = vpack.c.b16 %v2463, %v2461
    %v2578 = vpack.c.b16 %v2464, %v2462
    %v2579 = vpack.c.b16 %v2467, %v2465
    %v2580 = vpack.c.b16 %v2468, %v2466
    %v2581 = vpack.c.b16 %v2471, %v2469
    %v2582 = vpack.c.b16 %v2472, %v2470
    %v2583 = vpack.c.b16 %v2475, %v2473
    %v2584 = vpack.c.b16 %v2476, %v2474
    %v2585 = vpack.c.b16 %v2479, %v2477
    %v2586 = vpack.c.b16 %v2480, %v2478
    %v2587 = vpack.c.b16 %v2483, %v2481
    %v2588 = vpack.c.b16 %v2484, %v2482
    %v2589 = vpack.c.b16 %v2487, %v2485
    %v2590 = vpack.c.b16 %v2488, %v2486
    %v2591 = vpack.c.b16 %v2491, %v2489
    %v2592 = vpack.c.b16 %v2492, %v2490
    %v2593 = vpack.c.b16 %v2495, %v2493
    %v2594 = vpack.c.b16 %v2496, %v2494
    %v2595 = vpack.c.b16 %v2499, %v2497
    %v2596 = vpack.c.b16 %v2500, %v2498
    %v2597 = vpack.c.b16 %v2503, %v2501
    %v2598 = vpack.c.b16 %v2504, %v2502
    %v2599 = vpack.c.b16 %v2507, %v2505
    %v2600 = vpack.c.b16 %v2508, %v2506
    %v2601 = vpack.c.b16 %v2511, %v2509
    %v2602 = vpack.c.b16 %v2512, %v2510
    %v2603 = vpack.c.b16 %v2515, %v2513
    %v2604 = vpack.c.b16 %v2516, %v2514
    %v2605 = vpack.c.b16 %v2519, %v2517
    %v2606 = vpack.c.b16 %v2520, %v2518
    %v2607 = vpack.c.b16 %v2523, %v2521
    %v2608 = vpack.c.b16 %v2524, %v2522
    %v2609 = vpack.c.b16 %v2527, %v2525
    %v2610 = vpack.c.b16 %v2528, %v2526
    %v2611 = vpack.c.b16 %v2531, %v2529
    %v2612 = vpack.c.b16 %v2532, %v2530
    %v2613 = vpack.c.b16 %v2535, %v2533
    %v2614 = vpack.c.b16 %v2536, %v2534
    %v2615 = vpack.c.b16 %v2539, %v2537
    %v2616 = vpack.c.b16 %v2540, %v2538
    %v2617 = vpack.c.b16 %v2543, %v2541
    %v2618 = vpack.c.b16 %v2544, %v2542
    %v2619 = vpack.c.b16 %v2547, %v2545
    %v2620 = vpack.c.b16 %v2548, %v2546
    %v2621 = vpack.c.b16 %v2551, %v2549
    %v2622 = vpack.c.b16 %v2552, %v2550
    %v2623 = vpack.c.b16 %v2555, %v2553
    %v2624 = vpack.c.b16 %v2556, %v2554
    %v2625 = vpack.c.b16 %v2559, %v2557
    %v2626 = vpack.c.b16 %v2560, %v2558
    %v2627 = vpack.c.b16 %v2563, %v2561
    %v2628 = vpack.c.b16 %v2564, %v2562
    %2693 = vmatprep.subr.bf16.mxu0 %v2566
    %2694 = vmatpush1.bf16.msra.mxu0 %v2565
    %2695 = vmatprep.subr.bf16.mxu0 %v2568
    %2696 = vmatpush1.bf16.msra.mxu0 %v2567
    %2697 = vmatprep.subr.bf16.mxu0 %v2570
    %2698 = vmatpush1.bf16.msra.mxu0 %v2569
    %2699 = vmatprep.subr.bf16.mxu0 %v2572
    %2700 = vmatpush1.bf16.msra.mxu0 %v2571
    %2701 = vmatprep.subr.bf16.mxu0 %v2574
    %2702 = vmatpush1.bf16.msra.mxu0 %v2573
    %2703 = vmatprep.subr.bf16.mxu0 %v2576
    %2704 = vmatpush1.bf16.msra.mxu0 %v2575
    %2705 = vmatprep.subr.bf16.mxu0 %v2578
    %2706 = vmatpush1.bf16.msra.mxu0 %v2577
    %2707 = vmatprep.subr.bf16.mxu0 %v2580
    %2708 = vmatpush1.bf16.msra.mxu0 %v2579
    %2709 = vmatprep.subr.bf16.mxu0 %v2582
    %2710 = vmatpush1.bf16.msra.mxu0 %v2581
    %2711 = vmatprep.subr.bf16.mxu0 %v2584
    %2712 = vmatpush1.bf16.msra.mxu0 %v2583
    %2713 = vmatprep.subr.bf16.mxu0 %v2586
    %2714 = vmatpush1.bf16.msra.mxu0 %v2585
    %2715 = vmatprep.subr.bf16.mxu0 %v2588
    %2716 = vmatpush1.bf16.msra.mxu0 %v2587
    %2717 = vmatprep.subr.bf16.mxu0 %v2590
    %2718 = vmatpush1.bf16.msra.mxu0 %v2589
    %2719 = vmatprep.subr.bf16.mxu0 %v2592
    %2720 = vmatpush1.bf16.msra.mxu0 %v2591
    %2721 = vmatprep.subr.bf16.mxu0 %v2594
    %2722 = vmatpush1.bf16.msra.mxu0 %v2593
    %2723 = vmatprep.subr.bf16.mxu0 %v2596
    %2724 = vmatpush1.bf16.msra.mxu0 %v2595
    %2725 = vmatprep.mubr.bf16.mxu0 %v2294
    %2726 = vmatmul.mubr.bf16.gmra.mrb[0].mxu0 %v2293
    %v2727 = vpop.f32.mrb[0].mxu0
    %v2728 = vadd.f32 %v2366, %v2727
    %v2729 = vpop.f32.mrb[0].mxu0
    %v2730 = vadd.f32 %v2370, %v2729
    %v2731 = vpop.f32.mrb[0].mxu0
    %v2732 = vadd.f32 %v2366, %v2731
    %v2733 = vpop.f32.mrb[0].mxu0
    %v2734 = vadd.f32 %v2370, %v2733
    %2735 = vdwg.mxu0
    %2736 = vmatprep.subr.bf16.mxu0 %v2598
    %2737 = vmatpush1.bf16.msra.mxu0 %v2597
    %2738 = vmatprep.subr.bf16.mxu0 %v2600
    %2739 = vmatpush1.bf16.msra.mxu0 %v2599
    %2740 = vmatprep.subr.bf16.mxu0 %v2602
    %2741 = vmatpush1.bf16.msra.mxu0 %v2601
    %2742 = vmatprep.subr.bf16.mxu0 %v2604
    %2743 = vmatpush1.bf16.msra.mxu0 %v2603
    %2744 = vmatprep.subr.bf16.mxu0 %v2606
    %2745 = vmatpush1.bf16.msra.mxu0 %v2605
    %2746 = vmatprep.subr.bf16.mxu0 %v2608
    %2747 = vmatpush1.bf16.msra.mxu0 %v2607
    %2748 = vmatprep.subr.bf16.mxu0 %v2610
    %2749 = vmatpush1.bf16.msra.mxu0 %v2609
    %2750 = vmatprep.subr.bf16.mxu0 %v2612
    %2751 = vmatpush1.bf16.msra.mxu0 %v2611
    %2752 = vmatprep.subr.bf16.mxu0 %v2614
    %2753 = vmatpush1.bf16.msra.mxu0 %v2613
    %2754 = vmatprep.subr.bf16.mxu0 %v2616
    %2755 = vmatpush1.bf16.msra.mxu0 %v2615
    %2756 = vmatprep.subr.bf16.mxu0 %v2618
    %2757 = vmatpush1.bf16.msra.mxu0 %v2617
    %2758 = vmatprep.subr.bf16.mxu0 %v2620
    %2759 = vmatpush1.bf16.msra.mxu0 %v2619
    %2760 = vmatprep.subr.bf16.mxu0 %v2622
    %2761 = vmatpush1.bf16.msra.mxu0 %v2621
    %2762 = vmatprep.subr.bf16.mxu0 %v2624
    %2763 = vmatpush1.bf16.msra.mxu0 %v2623
    %2764 = vmatprep.subr.bf16.mxu0 %v2626
    %2765 = vmatpush1.bf16.msra.mxu0 %v2625
    %2766 = vmatprep.subr.bf16.mxu0 %v2628
    %2767 = vmatpush1.bf16.msra.mxu0 %v2627
    %2768 = vmatprep.mubr.bf16.mxu0 %v2296
    %2769 = vmatmul.mubr.bf16.gmra.mrb[0].mxu0 %v2295
    %v2770 = vpop.f32.mrb[0].mxu0
    %v2771 = vadd.f32 %v2728, %v2770
    %v2772 = vpop.f32.mrb[0].mxu0
    %v2773 = vadd.f32 %v2730, %v2772
    %v2774 = vpop.f32.mrb[0].mxu0
    %v2775 = vadd.f32 %v2732, %v2774
    %v2776 = vpop.f32.mrb[0].mxu0
    %v2777 = vadd.f32 %v2734, %v2776
    %2778 = vdwg.mxu0
    %v2779 = vmax.f32 %v2771, 0.0
    %v2780 = vmax.f32 %v2773, 0.0
    %v2781 = vmax.f32 %v2775, 0.0
    %v2782 = vmax.f32 %v2777, 0.0
    %v2783 = vpack.c.bf16 %v2781, %v2779
    %v2784 = vpack.c.bf16 %v2782, %v2780
    %v2785 = vld [vmem:[%s7] sm:$0xf]
    %v2786 = vld [vmem:[%s7 + $0x4] sm:$0xf]
    %v2787 = vld [vmem:[%s7 + $0x8] sm:$0xf]
    %v2788 = vld [vmem:[%s7 + $0xc] sm:$0xf]
    %v2789 = vld [vmem:[%s7 + $0x10] sm:$0xf]
    %v2790 = vld [vmem:[%s7 + $0x14] sm:$0xf]
    %v2791 = vld [vmem:[%s7 + $0x18] sm:$0xf]
    %v2792 = vld [vmem:[%s7 + $0x1c] sm:$0xf]
    %v2793 = vld [vmem:[%s7 + $0x20] sm:$0xf]
    %v2794 = vld [vmem:[%s7 + $0x24] sm:$0xf]
    %v2795 = vld [vmem:[%s7 + $0x28] sm:$0xf]
    %v2796 = vld [vmem:[%s7 + $0x2c] sm:$0xf]
    %v2797 = vld [vmem:[%s7 + $0x30] sm:$0xf]
    %v2798 = vld [vmem:[%s7 + $0x34] sm:$0xf]
    %v2799 = vld [vmem:[%s7 + $0x38] sm:$0xf]
    %v2800 = vld [vmem:[%s7 + $0x3c] sm:$0xf]
    %v2801 = vld [vmem:[%s7 + $0x40] sm:$0xf]
    %v2802 = vld [vmem:[%s7 + $0x44] sm:$0xf]
    %v2803 = vld [vmem:[%s7 + $0x48] sm:$0xf]
    %v2804 = vld [vmem:[%s7 + $0x4c] sm:$0xf]
    %v2805 = vld [vmem:[%s7 + $0x50] sm:$0xf]
    %v2806 = vld [vmem:[%s7 + $0x54] sm:$0xf]
    %v2807 = vld [vmem:[%s7 + $0x58] sm:$0xf]
    %v2808 = vld [vmem:[%s7 + $0x5c] sm:$0xf]
    %v2809 = vld [vmem:[%s7 + $0x60] sm:$0xf]
    %v2810 = vld [vmem:[%s7 + $0x64] sm:$0xf]
    %v2811 = vld [vmem:[%s7 + $0x68] sm:$0xf]
    %v2812 = vld [vmem:[%s7 + $0x6c] sm:$0xf]
    %v2813 = vld [vmem:[%s7 + $0x70] sm:$0xf]
    %v2814 = vld [vmem:[%s7 + $0x74] sm:$0xf]
    %v2815 = vld [vmem:[%s7 + $0x78] sm:$0xf]
    %v2816 = vld [vmem:[%s7 + $0x7c] sm:$0xf]
    %v2817 = vld [vmem:[%s8] sm:$0x1]
    %v2819 = vlaneseq
    %v2820 = vshrl.u32 %v2819, 7
    %v2821 = vsub.s32 0, %v2820
    %v2822 = vrot.slane %v2817, %v2821
    %v2856 = vunpack.c.l.b16 %v2785
    %v2857 = vunpack.c.l.b16 %v2786
    %v2858 = vunpack.c.l.b16 %v2787
    %v2859 = vunpack.c.l.b16 %v2788
    %v2860 = vunpack.c.l.b16 %v2789
    %v2861 = vunpack.c.l.b16 %v2790
    %v2862 = vunpack.c.l.b16 %v2791
    %v2863 = vunpack.c.l.b16 %v2792
    %v2864 = vunpack.c.l.b16 %v2793
    %v2865 = vunpack.c.l.b16 %v2794
    %v2866 = vunpack.c.l.b16 %v2795
    %v2867 = vunpack.c.l.b16 %v2796
    %v2868 = vunpack.c.l.b16 %v2797
    %v2869 = vunpack.c.l.b16 %v2798
    %v2870 = vunpack.c.l.b16 %v2799
    %v2871 = vunpack.c.l.b16 %v2800
    %v2872 = vunpack.c.l.b16 %v2801
    %v2873 = vunpack.c.l.b16 %v2802
    %v2874 = vunpack.c.l.b16 %v2803
    %v2875 = vunpack.c.l.b16 %v2804
    %v2876 = vunpack.c.l.b16 %v2805
    %v2877 = vunpack.c.l.b16 %v2806
    %v2878 = vunpack.c.l.b16 %v2807
    %v2879 = vunpack.c.l.b16 %v2808
    %v2880 = vunpack.c.l.b16 %v2809
    %v2881 = vunpack.c.l.b16 %v2810
    %v2882 = vunpack.c.l.b16 %v2811
    %v2883 = vunpack.c.l.b16 %v2812
    %v2884 = vunpack.c.l.b16 %v2813
    %v2885 = vunpack.c.l.b16 %v2814
    %v2886 = vunpack.c.l.b16 %v2815
    %v2887 = vunpack.c.l.b16 %v2816
    %v2888 = vpack.c.b16 %v2857, %v2856
    %v2889 = vpack.c.b16 %v2859, %v2858
    %v2890 = vpack.c.b16 %v2861, %v2860
    %v2891 = vpack.c.b16 %v2863, %v2862
    %v2892 = vpack.c.b16 %v2865, %v2864
    %v2893 = vpack.c.b16 %v2867, %v2866
    %v2894 = vpack.c.b16 %v2869, %v2868
    %v2895 = vpack.c.b16 %v2871, %v2870
    %v2896 = vpack.c.b16 %v2873, %v2872
    %v2897 = vpack.c.b16 %v2875, %v2874
    %v2898 = vpack.c.b16 %v2877, %v2876
    %v2899 = vpack.c.b16 %v2879, %v2878
    %v2900 = vpack.c.b16 %v2881, %v2880
    %v2901 = vpack.c.b16 %v2883, %v2882
    %v2902 = vpack.c.b16 %v2885, %v2884
    %v2903 = vpack.c.b16 %v2887, %v2886
    %2920 = vmatprep.subr.bf16.mxu0 0
    %2921 = vmatpush1.bf16.msra.mxu0 %v2888
    %2922 = vmatprep.subr.bf16.mxu0 0
    %2923 = vmatpush1.bf16.msra.mxu0 %v2889
    %2924 = vmatprep.subr.bf16.mxu0 0
    %2925 = vmatpush1.bf16.msra.mxu0 %v2890
    %2926 = vmatprep.subr.bf16.mxu0 0
    %2927 = vmatpush1.bf16.msra.mxu0 %v2891
    %2928 = vmatprep.subr.bf16.mxu0 0
    %2929 = vmatpush1.bf16.msra.mxu0 %v2892
    %2930 = vmatprep.subr.bf16.mxu0 0
    %2931 = vmatpush1.bf16.msra.mxu0 %v2893
    %2932 = vmatprep.subr.bf16.mxu0 0
    %2933 = vmatpush1.bf16.msra.mxu0 %v2894
    %2934 = vmatprep.subr.bf16.mxu0 0
    %2935 = vmatpush1.bf16.msra.mxu0 %v2895
    %2936 = vmatprep.subr.bf16.mxu0 0
    %2937 = vmatpush1.bf16.msra.mxu0 %v2896
    %2938 = vmatprep.subr.bf16.mxu0 0
    %2939 = vmatpush1.bf16.msra.mxu0 %v2897
    %2940 = vmatprep.subr.bf16.mxu0 0
    %2941 = vmatpush1.bf16.msra.mxu0 %v2898
    %2942 = vmatprep.subr.bf16.mxu0 0
    %2943 = vmatpush1.bf16.msra.mxu0 %v2899
    %2944 = vmatprep.subr.bf16.mxu0 0
    %2945 = vmatpush1.bf16.msra.mxu0 %v2900
    %2946 = vmatprep.subr.bf16.mxu0 0
    %2947 = vmatpush1.bf16.msra.mxu0 %v2901
    %2948 = vmatprep.subr.bf16.mxu0 0
    %2949 = vmatpush1.bf16.msra.mxu0 %v2902
    %2950 = vmatprep.subr.bf16.mxu0 0
    %2951 = vmatpush1.bf16.msra.mxu0 %v2903
    %2952 = vmatprep.mubr.bf16.mxu0 %v2784
    %2953 = vmatmul.mubr.bf16.gmra.mrb[0].mxu0 %v2783
    %v2954 = vpop.f32.mrb[0].mxu0
    %v2955 = vadd.f32 %v2822, %v2954
    %v2956 = vpop.f32.mrb[0].mxu0
    %v2957 = vpop.f32.mrb[0].mxu0
    %v2958 = vadd.f32 %v2822, %v2957
    %v2959 = vpop.f32.mrb[0].mxu0
    %2960 = vdwg.mxu0
    %v2961 = vmax.f32 %v2955, 0.0
    %v2962 = vmax.f32 %v2958, 0.0
    %v2963 = vld [vmem:[%s9] sm:$0x1]
    %v2964 = vld [vmem:[#allocation2] sm:$0x1]
    %2966 = vset.pattern.permute.xlu0 0
    %2967 = vperm.xlu0 %2966, %v2964
    %v2968 = vpop.permute.xlu0 %2967
    %v2970 = vlaneseq
    %v2971 = vshrl.u32 %v2970, 7
    %v2972 = vsub.s32 0, %v2971
    %v2973 = vrot.slane %v2968, %v2972
    %vm2974 = vcmask 130048
    %v2976 = vsel %vm2974, %v2963, 0
    %v2979 = vsel %vm2974, %v2961, 0
    %v2982 = vsel %vm2974, %v2962, 0
    %2984 = vmatprep.subr.mxu0 0.0
    %2985 = vmatpush1.xpose.msra.mxu0 %v2979
    %2986 = vmatprep.subr.mxu0 0.0
    %2987 = vmatpush1.xpose.msra.mxu0 %v2982
    %2988 = vmatprep.subr.mxu0 0.0
    %2989 = vmatpush1.xpose.msra.mxu0 0.0
    %2990 = vmatprep.subr.mxu0 0.0
    %2991 = vmatpush1.xpose.msra.mxu0 0.0
    %2992 = vmatprep.subr.mxu0 0.0
    %2993 = vmatpush1.xpose.msra.mxu0 0.0
    %2994 = vmatprep.subr.mxu0 0.0
    %2995 = vmatpush1.xpose.msra.mxu0 0.0
    %2996 = vmatprep.subr.mxu0 0.0
    %2997 = vmatpush1.xpose.msra.mxu0 0.0
    %2998 = vmatprep.subr.mxu0 0.0
    %2999 = vmatpush1.xpose.msra.mxu0 0.0
    %3000 = vmatprep.subr.mxu0 0.0
    %3001 = vmatpush1.xpose.msra.mxu0 0.0
    %3002 = vmatprep.subr.mxu0 0.0
    %3003 = vmatpush1.xpose.msra.mxu0 0.0
    %3004 = vmatprep.subr.mxu0 0.0
    %3005 = vmatpush1.xpose.msra.mxu0 0.0
    %3006 = vmatprep.subr.mxu0 0.0
    %3007 = vmatpush1.xpose.msra.mxu0 0.0
    %3008 = vmatprep.subr.mxu0 0.0
    %3009 = vmatpush1.xpose.msra.mxu0 0.0
    %3010 = vmatprep.subr.mxu0 0.0
    %3011 = vmatpush1.xpose.msra.mxu0 0.0
    %3012 = vmatprep.subr.mxu0 0.0
    %3013 = vmatpush1.xpose.msra.mxu0 0.0
    %3014 = vmatprep.subr.mxu0 0.0
    %3015 = vmatpush1.xpose.msra.mxu0 0.0
    %3016 = vmatprep.subr.mxu0 0.0
    %3017 = vmatpush1.xpose.msra.mxu0 0.0
    %3018 = vmatprep.subr.mxu0 0.0
    %3019 = vmatpush1.xpose.msra.mxu0 0.0
    %3020 = vmatprep.subr.mxu0 0.0
    %3021 = vmatpush1.xpose.msra.mxu0 0.0
    %3022 = vmatprep.subr.mxu0 0.0
    %3023 = vmatpush1.xpose.msra.mxu0 0.0
    %3024 = vmatprep.subr.mxu0 0.0
    %3025 = vmatpush1.xpose.msra.mxu0 0.0
    %3026 = vmatprep.subr.mxu0 0.0
    %3027 = vmatpush1.xpose.msra.mxu0 0.0
    %3028 = vmatprep.subr.mxu0 0.0
    %3029 = vmatpush1.xpose.msra.mxu0 0.0
    %3030 = vmatprep.subr.mxu0 0.0
    %3031 = vmatpush1.xpose.msra.mxu0 0.0
    %3032 = vmatprep.subr.mxu0 0.0
    %3033 = vmatpush1.xpose.msra.mxu0 0.0
    %3034 = vmatprep.subr.mxu0 0.0
    %3035 = vmatpush1.xpose.msra.mxu0 0.0
    %3036 = vmatprep.subr.mxu0 0.0
    %3037 = vmatpush1.xpose.msra.mxu0 0.0
    %3038 = vmatprep.subr.mxu0 0.0
    %3039 = vmatpush1.xpose.msra.mxu0 0.0
    %3040 = vmatprep.subr.mxu0 0.0
    %3041 = vmatpush1.xpose.msra.mxu0 0.0
    %3042 = vmatprep.subr.mxu0 0.0
    %3043 = vmatpush1.xpose.msra.mxu0 0.0
    %3044 = vmatprep.subr.mxu0 0.0
    %3045 = vmatpush1.xpose.msra.mxu0 0.0
    %3046 = vmatprep.subr.mxu0 0.0
    %3047 = vmatpush1.xpose.msra.mxu0 0.0
    %3048 = vmatprep.mubr.f32.mxu0 0.0
    %3049 = vmatmul.mubr.f32.gmra.mrb[0].mxu0 %v2976
    %v3050 = vpop.f32.mrb[0].mxu0
    %v3051 = vadd.f32 %v2973, %v3050
    %v3052 = vpop.f32.mrb[0].mxu0
    %3053 = vdwg.mxu0
    %v3054 = vsub.f32 0.0, %v3051
    %v3055 = vmul.f32 %v3054, 1.442695
    %v3056 = vpow.pop %v3055
    %v3057 = vadd.f32 %v3056, 1.0
    %v3058 = vrcp.pop %v3057
    %vm3059 = vcmask 122880
    %3060 = vst.msk [vmem:[#allocation3] sm:$0x1] %vm3059, %v3058
    // Predicated region
    $region46: #{net_forward.1} parent=1 // pred_check
      _
    $region47: #{net_forward.1} parent=1 // pred_check_branch
      %3062 = sbr.rel (0) target = $region49
    $region48: #{net_forward.1} parent=1 // pred_region
      %s3064 = ssub.s32 16, 16
      %3065 = vsyncadd [#allocation4], %s3064
      %s3067 = sshll.u32 [#allocation3], 4
      %s3068 = int_to_ptr.vmem [resolvable:$true] %s3067
      %3070 = dma.vmem_to_hbm [thread:$0]  %s3068, 16, %s11, [#allocation4]
    $region49: #{net_forward.1} parent=1 // pred_fallthru
      _
    // Predicated region
    $region50: #{net_forward.1} parent=1 // pred_check
      _
    $region51: #{net_forward.1} parent=1 // pred_check_branch
      %3072 = sbr.rel (0) target = $region53
    $region52: #{net_forward.1} parent=1 // pred_region
      %3073 = dma.done [#allocation4], 16
    $region53: #{net_forward.1} parent=1 // pred_fallthru
      _
    %3074 = vsyncpa [#allocation4], 1

</llo_original>
